<compile_context>
chip_gen: v5e
topology: v5e:2x2
jax: 0.10.0
libtpu: 0.0.40
codegen_flags: <defaults>
</compile_context>

<pallas_src>
import functools

import jax
import jax.numpy as jnp
from jax.experimental import pallas as pl
from jax.experimental.pallas import tpu as pltpu

# ----- model dimensions (stand-in for the `params` dict in the original code) -----
D_IN = 32      # params['input_size_low_level_control']
D_CPG = 16     # params['cpg_param_size']
LANE = 128     # lane width of the packed output slab

# Packed output slab lane layout.
Z_LO, Z_HI = 0, D_IN                       # z   (encoder out)   lanes  0..31
ZT_LO, ZT_HI = D_IN, 2 * D_IN              # z_  (transform out) lanes 32..63
Y_LO, Y_HI = 2 * D_IN, 2 * D_IN + D_CPG    # y   (decoder out)   lanes 64..79


def _round_up(n, m):
    return ((n + m - 1) // m) * m


def controller_v4_kernel(x_ref, xt_ref, w1x_ref, w1t_ref, b1_ref, w2_ref, out_ref):
    """One batch tile; writes a single lane-dense [tb, 128] packed output slab."""
    hp = jax.lax.Precision.HIGHEST

    # Stage 1 (fused encoder + transform via block-diagonal padded weights):
    #   s1[:,  0:32] = x  @ w_enc + b_enc   (= z)
    #   s1[:, 32:64] = x_ @ w_tr  + b_tr    (= z_)
    #   s1[:, 64:80] = b_dec                (decoder bias pre-placed)
    s1 = (jnp.dot(x_ref[...], w1x_ref[...],
                  preferred_element_type=jnp.float32, precision=hp)
          + jnp.dot(xt_ref[...], w1t_ref[...],
                    preferred_element_type=jnp.float32, precision=hp)
          + b1_ref[...])

    # Stage 2 (decoder): w2 is zero except rows 0..31 -> cols 64..79, so
    #   out[:, 64:80] = b_dec + z @ w_dec  (= y); all other lanes pass through.
    # Intentionally NOT slicing s1[:, :32] first: zero contraction rows are free
    # on the MXU, a 32-lane slice would add a relayout on the real critical path.
    out_ref[...] = s1 + jnp.dot(s1, w2_ref[...],
                                preferred_element_type=jnp.float32, precision=hp)


def fuse_weights(w):
    """One-time (static) construction of the fused block-diagonal padded weights."""
    w1x = jnp.zeros((D_CPG, LANE), jnp.float32).at[:, Z_LO:Z_HI].set(w["w_enc"])
    w1t = jnp.zeros((D_IN, LANE), jnp.float32).at[:, ZT_LO:ZT_HI].set(w["w_tr"])
    b1 = jnp.zeros((1, LANE), jnp.float32)
    b1 = b1.at[:, Z_LO:Z_HI].set(w["b_enc"])
    b1 = b1.at[:, ZT_LO:ZT_HI].set(w["b_tr"])
    b1 = b1.at[:, Y_LO:Y_HI].set(w["b_dec"])
    w2 = jnp.zeros((LANE, LANE), jnp.float32).at[Z_LO:Z_HI, Y_LO:Y_HI].set(w["w_dec"])
    return {"w1x": w1x, "w1t": w1t, "b1": b1, "w2": w2}


@functools.partial(jax.jit, static_argnames=("block_rows",))
def controller_v4_forward(x, x_, wf, block_rows=1024):
    """x: [B, D_CPG], x_: [B, D_IN]. wf: fused weights (see fuse_weights)."""
    B = x.shape[0]
    # Largest tile up to block_rows (amortizes per-step overhead), but capped so the
    # grid has >= 2 steps when possible so v7x's two TensorCores both get work.
    tb = max(8, min(_round_up(block_rows, 8), _round_up(pl.cdiv(B, 2), 8)))
    grid = (pl.cdiv(B, tb),)   # partial last block handled by Pallas; no jnp.pad copy

    rows = lambda i: (i, 0)        # batch-tiled arrays
    resident = lambda i: (0, 0)    # constant index_map -> weights stay resident in VMEM

    out = pl.pallas_call(
        controller_v4_kernel,
        out_shape=jax.ShapeDtypeStruct((B, LANE), jnp.float32),
        grid=grid,
        in_specs=[
            pl.BlockSpec((tb, D_CPG), rows),        # x
            pl.BlockSpec((tb, D_IN), rows),         # x_
            pl.BlockSpec((D_CPG, LANE), resident),  # fused stage-1 weight for x
            pl.BlockSpec((D_IN, LANE), resident),   # fused stage-1 weight for x_
            pl.BlockSpec((1, LANE), resident),      # fused bias (b_enc|b_tr|b_dec)
            pl.BlockSpec((LANE, LANE), resident),   # padded decoder weight
        ],
        out_specs=pl.BlockSpec((tb, LANE), rows),
        compiler_params=pltpu.CompilerParams(
            dimension_semantics=("parallel",)),
    )(x, x_, wf["w1x"], wf["w1t"], wf["b1"], wf["w2"])

    # Unpack the single slab (cheap wrapper-side reads, not compute).
    y = out[:, Y_LO:Y_HI]
    z = out[:, Z_LO:Z_HI]
    z_ = out[:, ZT_LO:ZT_HI]
    return y, z, z_


def init_params(key):
    """Deterministic init mimicking torch.nn.Linear defaults (uniform +/- 1/sqrt(fan_in)).
    Weights stored as [in, out] so forward computes x @ W + b."""
    ks = jax.random.split(key, 6)

    def linear(kw, kb, d_in, d_out):
        bound = 1.0 / (d_in ** 0.5)
        w = jax.random.uniform(kw, (d_in, d_out), jnp.float32, -bound, bound)
        b = jax.random.uniform(kb, (1, d_out), jnp.float32, -bound, bound)
        return w, b

    w_enc, b_enc = linear(ks[0], ks[1], D_CPG, D_IN)   # encoder:  Linear(16 -> 32)
    w_dec, b_dec = linear(ks[2], ks[3], D_IN, D_CPG)   # decoder:  Linear(32 -> 16)
    w_tr, b_tr = linear(ks[4], ks[5], D_IN, D_IN)      # transform:Linear(32 -> 32)
    return {"w_enc": w_enc, "b_enc": b_enc,
            "w_dec": w_dec, "b_dec": b_dec,
            "w_tr": w_tr, "b_tr": b_tr}


def reference_forward(x, x_, w):
    hp = jax.lax.Precision.HIGHEST
    z_ = jnp.dot(x_, w["w_tr"], precision=hp) + w["b_tr"]
    z = jnp.dot(x, w["w_enc"], precision=hp) + w["b_enc"]
    y = jnp.dot(z, w["w_dec"], precision=hp) + w["b_dec"]
    return y, z, z_


if __name__ == "__main__":
    key = jax.random.PRNGKey(0)
    k_param, k_x, k_xt = jax.random.split(key, 3)

    weights = init_params(k_param)
    fused = fuse_weights(weights)

    # Small demo batch; deliberately not a multiple of the tile so the partial
    # last block (no-padding path) is exercised. Wrapper handles any batch size.
    B = 50
    x = jax.random.normal(k_x, (B, D_CPG), dtype=jnp.float32)
    x_ = jax.random.normal(k_xt, (B, D_IN), dtype=jnp.float32)

    # block_rows=32 so the demo actually exercises the batch grid (grid=(2,)).
    y, z, z_ = controller_v4_forward(x, x_, fused, block_rows=32)
    y, z, z_ = jax.block_until_ready((y, z, z_))

    y_ref, z_ref, zt_ref = reference_forward(x, x_, weights)
    assert y.shape == (B, D_CPG) and z.shape == (B, D_IN) and z_.shape == (B, D_IN)
    assert jnp.allclose(y, y_ref, atol=1e-5, rtol=1e-5), "y mismatch vs reference"
    assert jnp.allclose(z, z_ref, atol=1e-5, rtol=1e-5), "z mismatch vs reference"
    assert jnp.allclose(z_, zt_ref, atol=1e-5, rtol=1e-5), "z_ mismatch vs reference"

    print("KERNEL_OK")
</pallas_src>

<mosaic_0001>
module attributes {stable_mosaic.version = 11 : i64} {
  func.func @controller_v4_kernel(%arg0: i32, %arg1: memref<32x16xf32, #tpu.memory_space<vmem>>, %arg2: memref<32x32xf32, #tpu.memory_space<vmem>>, %arg3: memref<16x128xf32, #tpu.memory_space<vmem>>, %arg4: memref<32x128xf32, #tpu.memory_space<vmem>>, %arg5: memref<1x128xf32, #tpu.memory_space<vmem>>, %arg6: memref<128x128xf32, #tpu.memory_space<vmem>>, %arg7: memref<32x128xf32, #tpu.memory_space<vmem>>) attributes {dimension_semantics = [#tpu.dimension_semantics<parallel>], iteration_bounds = array<i64: 2>, scalar_prefetch = 0 : i64, scratch_operands = 0 : i64, tpu.core_type = #tpu.core_type<tc>, window_params = [{transform_indices = @transform_0, window_bounds = array<i64: 32, 16>}, {transform_indices = @transform_1, window_bounds = array<i64: 32, 32>}, {pipeline_mode = #tpu.pipeline_mode<synchronous>, transform_indices = @transform_2, window_bounds = array<i64: 16, 128>}, {pipeline_mode = #tpu.pipeline_mode<synchronous>, transform_indices = @transform_3, window_bounds = array<i64: 32, 128>}, {pipeline_mode = #tpu.pipeline_mode<synchronous>, transform_indices = @transform_4, window_bounds = array<i64: 1, 128>}, {pipeline_mode = #tpu.pipeline_mode<synchronous>, transform_indices = @transform_5, window_bounds = array<i64: 128, 128>}, {transform_indices = @transform_6, window_bounds = array<i64: 32, 128>}]} {
    %c0 = arith.constant 0 : index
    %c0_0 = arith.constant 0 : index
    %0 = vector.load %arg1[%c0, %c0_0] : memref<32x16xf32, #tpu.memory_space<vmem>>, vector<32x16xf32>
    %c0_1 = arith.constant 0 : index
    %c0_2 = arith.constant 0 : index
    %1 = vector.load %arg3[%c0_1, %c0_2] : memref<16x128xf32, #tpu.memory_space<vmem>>, vector<16x128xf32>
    %cst = arith.constant dense<0.000000e+00> : vector<32x128xf32>
    %2 = tpu.matmul %0, %1, %cst {dimension_numbers = #tpu.dot_dimension_numbers<[1], [0], [0], [1], [0, 0, 1, 1], [], []>, precision = #tpu.contract_precision<fp32>} : vector<32x16xf32>, vector<16x128xf32>, vector<32x128xf32> -> vector<32x128xf32>
    %c0_3 = arith.constant 0 : index
    %c0_4 = arith.constant 0 : index
    %3 = vector.load %arg2[%c0_3, %c0_4] : memref<32x32xf32, #tpu.memory_space<vmem>>, vector<32x32xf32>
    %c0_5 = arith.constant 0 : index
    %c0_6 = arith.constant 0 : index
    %4 = vector.load %arg4[%c0_5, %c0_6] : memref<32x128xf32, #tpu.memory_space<vmem>>, vector<32x128xf32>
    %cst_7 = arith.constant dense<0.000000e+00> : vector<32x128xf32>
    %5 = tpu.matmul %3, %4, %cst_7 {dimension_numbers = #tpu.dot_dimension_numbers<[1], [0], [0], [1], [0, 0, 1, 1], [], []>, precision = #tpu.contract_precision<fp32>} : vector<32x32xf32>, vector<32x128xf32>, vector<32x128xf32> -> vector<32x128xf32>
    %6 = arith.addf %2, %5 : vector<32x128xf32>
    %c0_8 = arith.constant 0 : index
    %c0_9 = arith.constant 0 : index
    %7 = vector.load %arg5[%c0_8, %c0_9] : memref<1x128xf32, #tpu.memory_space<vmem>>, vector<1x128xf32>
    %8 = vector.broadcast %7 : vector<1x128xf32> to vector<32x128xf32>
    %9 = arith.addf %6, %8 : vector<32x128xf32>
    %c0_10 = arith.constant 0 : index
    %c0_11 = arith.constant 0 : index
    %10 = vector.load %arg6[%c0_10, %c0_11] : memref<128x128xf32, #tpu.memory_space<vmem>>, vector<128x128xf32>
    %cst_12 = arith.constant dense<0.000000e+00> : vector<32x128xf32>
    %11 = tpu.matmul %9, %10, %cst_12 {dimension_numbers = #tpu.dot_dimension_numbers<[1], [0], [0], [1], [0, 0, 1, 1], [], []>, precision = #tpu.contract_precision<fp32>} : vector<32x128xf32>, vector<128x128xf32>, vector<32x128xf32> -> vector<32x128xf32>
    %12 = arith.addf %9, %11 : vector<32x128xf32>
    %c0_13 = arith.constant 0 : index
    %c0_14 = arith.constant 0 : index
    %13 = vector.load %arg7[%c0_13, %c0_14] : memref<32x128xf32, #tpu.memory_space<vmem>>, vector<32x128xf32>
    tpu.vector_store %arg7[%c0_13, %c0_14], %12 {strides = array<i32>} : memref<32x128xf32, #tpu.memory_space<vmem>>, vector<32x128xf32>,
    return
  }
  func.func @transform_0(%arg0: i32) -> (i32, i32) {
    %c0_i32 = arith.constant 0 : i32
    %c0_i32_0 = arith.constant 0 : i32
    return %arg0, %c0_i32 : i32, i32
  }
  func.func @transform_1(%arg0: i32) -> (i32, i32) {
    %c0_i32 = arith.constant 0 : i32
    %c0_i32_0 = arith.constant 0 : i32
    return %arg0, %c0_i32 : i32, i32
  }
  func.func @transform_2(%arg0: i32) -> (i32, i32) {
    %c0_i32 = arith.constant 0 : i32
    %c0_i32_0 = arith.constant 0 : i32
    %c0_i32_1 = arith.constant 0 : i32
    return %c0_i32, %c0_i32_0 : i32, i32
  }
  func.func @transform_3(%arg0: i32) -> (i32, i32) {
    %c0_i32 = arith.constant 0 : i32
    %c0_i32_0 = arith.constant 0 : i32
    %c0_i32_1 = arith.constant 0 : i32
    return %c0_i32, %c0_i32_0 : i32, i32
  }
  func.func @transform_4(%arg0: i32) -> (i32, i32) {
    %c0_i32 = arith.constant 0 : i32
    %c0_i32_0 = arith.constant 0 : i32
    %c0_i32_1 = arith.constant 0 : i32
    return %c0_i32, %c0_i32_0 : i32, i32
  }
  func.func @transform_5(%arg0: i32) -> (i32, i32) {
    %c0_i32 = arith.constant 0 : i32
    %c0_i32_0 = arith.constant 0 : i32
    %c0_i32_1 = arith.constant 0 : i32
    return %c0_i32, %c0_i32_0 : i32, i32
  }
  func.func @transform_6(%arg0: i32) -> (i32, i32) {
    %c0_i32 = arith.constant 0 : i32
    %c0_i32_0 = arith.constant 0 : i32
    return %arg0, %c0_i32 : i32, i32
  }
}

</mosaic_0001>

<llo_original>
// kernel: controller_v4_forward.1
$region0: #{controller_v4_forward.1}
  #allocation0 [shape = 'u32[]', space=smem, size = 0x4, offset = 0x4, fixed_abs, tag = 'smem constant byte address 0x4 - core index']
  #allocation1 [shape = 'u32[72,128]{1,0:T(1,128)}', space=vmem, size = 0x9000, scoped, tag = 'internal scratch']
  %s0 = inlined_call_operand.vmem [shape: f32[50,16], index: 0, kind: input, shape index: {}]
  %s1 = inlined_call_operand.vmem [shape: f32[50,32], index: 1, kind: input, shape index: {}]
  %s2 = inlined_call_operand.hbm [shape: f32[16,128], index: 2, kind: input, shape index: {}]
  %s3 = inlined_call_operand.hbm [shape: f32[32,128], index: 3, kind: input, shape index: {}]
  %s4 = inlined_call_operand.vmem [shape: f32[1,128], index: 4, kind: input, shape index: {}]
  %s5 = inlined_call_operand.vmem [shape: f32[128,128], index: 5, kind: input, shape index: {}]
  %s6 = inlined_call_operand.vmem [shape: f32[50,128], index: 6, kind: output, shape index: {}]
  %s7 = sld [smem:[#allocation0]]
  $region113: #{controller_v4_forward.1} parent=0
    _
  %s9 = ssub.s32 1, %s7
  %s10 = scalar_select 0, %s9, %s7
  $region1: #{controller_v4_forward.1} parent=0
    #allocation2 [shape = 'u8[8192]{0}', space=vmem, size = 0x2000, scoped, tag = 'input window, operand 2, single buffered']
    #allocation3 [shape = 's32[2]{0}', space=sflag, size = 0x8, scoped, tag = 'scoped memory for controller_v4_forward.1']
    #allocation4 [shape = 'u8[16384]{0}', space=vmem, size = 0x4000, scoped, tag = 'input window, operand 3, single buffered']
    #allocation5 [shape = 's32[1]{0}', space=sflag, size = 0x4, scoped, tag = 'scoped memory for controller_v4_forward.1']
    #allocation6 [shape = 'u8[32768]{0}', space=vmem, size = 0x8000, scoped, tag = 'output window, operand 0']
    %11 = vsyncpa [#allocation3], 0
    %12 = vsyncpa [#allocation5], 0
    loop: start=0, step=1, limit=4
    $region2: #{controller_v4_forward.1} parent=1 // loop_pre_header
      _
    $region3: #{controller_v4_forward.1} parent=1 // loop_header
      %s14 = sphi 0, %s18
      %p15 = scmp.ge.s32.totalorder %s14, 4
      %s24 = sphi 0, %s26
      %s27 = sphi 0, %s24
      %s28 = sphi 0, %s27
      %s44 = sphi 0, %s28
      %s50 = sphi 0, %s52
      %s53 = sphi 0, %s50
      %s54 = sphi 0, %s53
      %s70 = sphi 0, %s54
      %s74 = sphi 0, %s74
      %s76 = sphi 0, %s74
      %s77 = sphi 0, %s76
      %s91 = sphi 0, %s77
      %s95 = sphi 0, %s95
      %s97 = sphi 0, %s95
      %s98 = sphi 0, %s97
      %s112 = sphi 0, %s98
      %s116 = sphi 0, %s116
      %s118 = sphi 0, %s116
      %s119 = sphi 0, %s118
      %s133 = sphi 0, %s119
      %s137 = sphi 0, %s137
      %s139 = sphi 0, %s137
      %s140 = sphi 0, %s139
      %s154 = sphi 0, %s140
      %s160 = sphi 0, %s162
      %s163 = sphi 0, %s160
      %s164 = sphi 0, %s163
      %s180 = sphi 0, %s164
    $region4: #{controller_v4_forward.1} parent=1 // loop_header_branch
      %17 = sbr.rel (%p15) target = $region8
    $region5: #{controller_v4_forward.1} parent=1 // loop_body
      %s19 = ssub.s32 %s14, 1
      %s20 = ssub.s32 %s14, 2
      %s21 = sadd.s32 %s14, 1
      %s22 = ssub.s32 %s14, %s21
      %p23 = scmp.eq.s32.totalorder %s22, 0
      %s25 = sadd.s32 %s24, 1
      %s26 = scalar_select %p23, %s24, %s25
      %p29 = pneg %p23
      %p30 = scmp.eq.s32.totalorder %s14, 1
      %p31 = por %p29, %p30
      %p32 = scmp.ne.s32.totalorder %s24, %s27
      %p33 = scmp.eq.s32.totalorder %s14, 0
      %p34 = por %p32, %p33
      %p35 = scmp.ne.s32.totalorder %s24, %s27
      %p36 = scmp.eq.s32.totalorder %s19, 1
      %p37 = por %p35, %p36
      %p38 = scmp.ne.s32.totalorder %s27, %s28
      %p39 = scmp.eq.s32.totalorder %s19, 0
      %p40 = por %p38, %p39
      %p41 = scmp.ne.s32.totalorder %s27, %s28
      %p42 = scmp.eq.s32.totalorder %s20, 1
      %p43 = por %p41, %p42
      %p45 = scmp.ne.s32.totalorder %s28, %s44
      %p46 = scmp.eq.s32.totalorder %s20, 0
      %p47 = por %p45, %p46
      %s48 = ssub.s32 %s14, %s21
      %p49 = scmp.eq.s32.totalorder %s48, 0
      %s51 = sadd.s32 %s50, 1
      %s52 = scalar_select %p49, %s50, %s51
      %p55 = pneg %p49
      %p56 = scmp.eq.s32.totalorder %s14, 1
      %p57 = por %p55, %p56
      %p58 = scmp.ne.s32.totalorder %s50, %s53
      %p59 = scmp.eq.s32.totalorder %s14, 0
      %p60 = por %p58, %p59
      %p61 = scmp.ne.s32.totalorder %s50, %s53
      %p62 = scmp.eq.s32.totalorder %s19, 1
      %p63 = por %p61, %p62
      %p64 = scmp.ne.s32.totalorder %s53, %s54
      %p65 = scmp.eq.s32.totalorder %s19, 0
      %p66 = por %p64, %p65
      %p67 = scmp.ne.s32.totalorder %s53, %s54
      %p68 = scmp.eq.s32.totalorder %s20, 1
      %p69 = por %p67, %p68
      %p71 = scmp.ne.s32.totalorder %s54, %s70
      %p72 = scmp.eq.s32.totalorder %s20, 0
      %p73 = por %p71, %p72
      %s75 = sadd.s32 %s74, 1
      %p78 = scmp.eq.s32.totalorder %s14, 1
      %p79 = scmp.ne.s32.totalorder %s74, %s76
      %p80 = scmp.eq.s32.totalorder %s14, 0
      %p81 = por %p79, %p80
      %p82 = scmp.ne.s32.totalorder %s74, %s76
      %p83 = scmp.eq.s32.totalorder %s19, 1
      %p84 = por %p82, %p83
      %p85 = scmp.ne.s32.totalorder %s76, %s77
      %p86 = scmp.eq.s32.totalorder %s19, 0
      %p87 = por %p85, %p86
      %p88 = scmp.ne.s32.totalorder %s76, %s77
      %p89 = scmp.eq.s32.totalorder %s20, 1
      %p90 = por %p88, %p89
      %p92 = scmp.ne.s32.totalorder %s77, %s91
      %p93 = scmp.eq.s32.totalorder %s20, 0
      %p94 = por %p92, %p93
      %s96 = sadd.s32 %s95, 1
      %p99 = scmp.eq.s32.totalorder %s14, 1
      %p100 = scmp.ne.s32.totalorder %s95, %s97
      %p101 = scmp.eq.s32.totalorder %s14, 0
      %p102 = por %p100, %p101
      %p103 = scmp.ne.s32.totalorder %s95, %s97
      %p104 = scmp.eq.s32.totalorder %s19, 1
      %p105 = por %p103, %p104
      %p106 = scmp.ne.s32.totalorder %s97, %s98
      %p107 = scmp.eq.s32.totalorder %s19, 0
      %p108 = por %p106, %p107
      %p109 = scmp.ne.s32.totalorder %s97, %s98
      %p110 = scmp.eq.s32.totalorder %s20, 1
      %p111 = por %p109, %p110
      %p113 = scmp.ne.s32.totalorder %s98, %s112
      %p114 = scmp.eq.s32.totalorder %s20, 0
      %p115 = por %p113, %p114
      %s117 = sadd.s32 %s116, 1
      %p120 = scmp.eq.s32.totalorder %s14, 1
      %p121 = scmp.ne.s32.totalorder %s116, %s118
      %p122 = scmp.eq.s32.totalorder %s14, 0
      %p123 = por %p121, %p122
      %p124 = scmp.ne.s32.totalorder %s116, %s118
      %p125 = scmp.eq.s32.totalorder %s19, 1
      %p126 = por %p124, %p125
      %p127 = scmp.ne.s32.totalorder %s118, %s119
      %p128 = scmp.eq.s32.totalorder %s19, 0
      %p129 = por %p127, %p128
      %p130 = scmp.ne.s32.totalorder %s118, %s119
      %p131 = scmp.eq.s32.totalorder %s20, 1
      %p132 = por %p130, %p131
      %p134 = scmp.ne.s32.totalorder %s119, %s133
      %p135 = scmp.eq.s32.totalorder %s20, 0
      %p136 = por %p134, %p135
      %s138 = sadd.s32 %s137, 1
      %p141 = scmp.eq.s32.totalorder %s14, 1
      %p142 = scmp.ne.s32.totalorder %s137, %s139
      %p143 = scmp.eq.s32.totalorder %s14, 0
      %p144 = por %p142, %p143
      %p145 = scmp.ne.s32.totalorder %s137, %s139
      %p146 = scmp.eq.s32.totalorder %s19, 1
      %p147 = por %p145, %p146
      %p148 = scmp.ne.s32.totalorder %s139, %s140
      %p149 = scmp.eq.s32.totalorder %s19, 0
      %p150 = por %p148, %p149
      %p151 = scmp.ne.s32.totalorder %s139, %s140
      %p152 = scmp.eq.s32.totalorder %s20, 1
      %p153 = por %p151, %p152
      %p155 = scmp.ne.s32.totalorder %s140, %s154
      %p156 = scmp.eq.s32.totalorder %s20, 0
      %p157 = por %p155, %p156
      %s158 = ssub.s32 %s14, %s21
      %p159 = scmp.eq.s32.totalorder %s158, 0
      %s161 = sadd.s32 %s160, 1
      %s162 = scalar_select %p159, %s160, %s161
      %p165 = pneg %p159
      %p166 = scmp.eq.s32.totalorder %s14, 1
      %p167 = por %p165, %p166
      %p168 = scmp.ne.s32.totalorder %s160, %s163
      %p169 = scmp.eq.s32.totalorder %s14, 0
      %p170 = por %p168, %p169
      %p171 = scmp.ne.s32.totalorder %s160, %s163
      %p172 = scmp.eq.s32.totalorder %s19, 1
      %p173 = por %p171, %p172
      %p174 = scmp.ne.s32.totalorder %s163, %s164
      %p175 = scmp.eq.s32.totalorder %s19, 0
      %p176 = por %p174, %p175
      %p177 = scmp.ne.s32.totalorder %s163, %s164
      %p178 = scmp.eq.s32.totalorder %s20, 1
      %p179 = por %p177, %p178
      %p181 = scmp.ne.s32.totalorder %s164, %s180
      %p182 = scmp.eq.s32.totalorder %s20, 0
      %p183 = por %p181, %p182
      %p184 = scmp.le.s32.totalorder 1, %s14
      %p185 = scmp.lt.s32.totalorder %s14, 3
      %p186 = pnand %p184, %p185
      %p187 = pneg %p186
      // Predicated region
      $region9: #{controller_v4_forward.1} parent=5 // pred_check
        _
      $region10: #{controller_v4_forward.1} parent=5 // pred_check_branch
        %189 = sbr.rel (%p186) target = $region12
      $region11: #{controller_v4_forward.1} parent=5 // pred_region
        %s190 = ssub.s32 %s14, 1
        // Predicated region
        $region13: #{controller_v4_forward.1} parent=11 // pred_check
          %p191 = pneg %p87
        $region14: #{controller_v4_forward.1} parent=11 // pred_check_branch
          %193 = sbr.rel (%p191) target = $region16
        $region15: #{controller_v4_forward.1} parent=11 // pred_region
          %195 = vsyncadd [#allocation3], 0
          %s196 = sshll.u32 %s2, 4
          %s197 = int_to_ptr.hbm [resolvable:$true] %s196
          %s198 = sshll.u32 [#allocation2], 4
          %s199 = int_to_ptr.vmem [resolvable:$true] %s198
          %204 = dma.hbm_to_vmem [thread:$0]  %s197, 256, %s199, [#allocation3], 128, 128, 8
        $region16: #{controller_v4_forward.1} parent=11 // pred_fallthru
          _
        // Predicated region
        $region17: #{controller_v4_forward.1} parent=11 // pred_check
          %p205 = pneg %p108
        $region18: #{controller_v4_forward.1} parent=11 // pred_check_branch
          %207 = sbr.rel (%p205) target = $region20
        $region19: #{controller_v4_forward.1} parent=11 // pred_region
          %209 = vsyncadd [#allocation5], 0
          %s210 = sshll.u32 %s3, 4
          %s211 = int_to_ptr.hbm [resolvable:$true] %s210
          %s212 = sshll.u32 [#allocation4], 4
          %s213 = int_to_ptr.vmem [resolvable:$true] %s212
          %218 = dma.hbm_to_vmem [thread:$0]  %s211, 512, %s213, [#allocation5], 128, 128, 8
        $region20: #{controller_v4_forward.1} parent=11 // pred_fallthru
          _
        // Predicated region
        $region21: #{controller_v4_forward.1} parent=11 // pred_check
          %p219 = pneg %p129
        $region22: #{controller_v4_forward.1} parent=11 // pred_check_branch
          %221 = sbr.rel (%p219) target = $region24
        $region23: #{controller_v4_forward.1} parent=11 // pred_region
          _
        $region24: #{controller_v4_forward.1} parent=11 // pred_fallthru
          _
        // Predicated region
        $region25: #{controller_v4_forward.1} parent=11 // pred_check
          %p222 = pneg %p150
        $region26: #{controller_v4_forward.1} parent=11 // pred_check_branch
          %224 = sbr.rel (%p222) target = $region28
        $region27: #{controller_v4_forward.1} parent=11 // pred_region
          _
        $region28: #{controller_v4_forward.1} parent=11 // pred_fallthru
          _
      $region12: #{controller_v4_forward.1} parent=5 // pred_fallthru
        _
      %p225 = scmp.lt.s32.totalorder %s14, 2
      // Predicated region
      $region29: #{controller_v4_forward.1} parent=5 // pred_check
        %p226 = pneg %p225
      $region30: #{controller_v4_forward.1} parent=5 // pred_check_branch
        %228 = sbr.rel (%p226) target = $region32
      $region31: #{controller_v4_forward.1} parent=5 // pred_region
        // Predicated region
        $region33: #{controller_v4_forward.1} parent=31 // pred_check
          %p229 = pneg %p34
        $region34: #{controller_v4_forward.1} parent=31 // pred_check_branch
          %231 = sbr.rel (%p229) target = $region36
        $region35: #{controller_v4_forward.1} parent=31 // pred_region
          %s232 = smul.u32 4, %s14
          %s233 = ssub.s32 7, %s232
          %p234 = scmp.lt.s32.totalorder %s233, 4
          %s235 = scalar_select %p234, %s233, 4
          %s236 = smul.u32 8, %s235
          %p237 = scmp.lt.s32.totalorder %s232, 6
          %s238 = scalar_select %p237, %s232, 6
          %s239 = smul.addr %s238, 8
          %s240 = scalar_lea.vmem %s0, %s239
          %s241 = smul.u32 4, %s14
          %s242 = ssub.s32 7, %s241
          %p243 = scmp.lt.s32.totalorder %s242, 4
          %s244 = scalar_select %p243, %s242, 4
          %s245 = smul.u32 8, %s244
        $region36: #{controller_v4_forward.1} parent=31 // pred_fallthru
          _
        // Predicated region
        $region37: #{controller_v4_forward.1} parent=31 // pred_check
          %p246 = pneg %p60
        $region38: #{controller_v4_forward.1} parent=31 // pred_check_branch
          %248 = sbr.rel (%p246) target = $region40
        $region39: #{controller_v4_forward.1} parent=31 // pred_region
          %s249 = smul.u32 4, %s14
          %s250 = ssub.s32 7, %s249
          %p251 = scmp.lt.s32.totalorder %s250, 4
          %s252 = scalar_select %p251, %s250, 4
          %s253 = smul.u32 8, %s252
          %p254 = scmp.lt.s32.totalorder %s249, 6
          %s255 = scalar_select %p254, %s249, 6
          %s256 = smul.addr %s255, 8
          %s257 = scalar_lea.vmem %s1, %s256
          %s258 = smul.u32 4, %s14
          %s259 = ssub.s32 7, %s258
          %p260 = scmp.lt.s32.totalorder %s259, 4
          %s261 = scalar_select %p260, %s259, 4
          %s262 = smul.u32 8, %s261
        $region40: #{controller_v4_forward.1} parent=31 // pred_fallthru
          _
      $region32: #{controller_v4_forward.1} parent=5 // pred_fallthru
        _
      %p263 = scmp.le.s32.totalorder 1, %s14
      %p264 = scmp.lt.s32.totalorder %s14, 3
      %p265 = pnand %p263, %p264
      %p266 = pneg %p265
      // Predicated region
      $region41: #{controller_v4_forward.1} parent=5 // pred_check
        _
      $region42: #{controller_v4_forward.1} parent=5 // pred_check_branch
        %268 = sbr.rel (%p265) target = $region44
      $region43: #{controller_v4_forward.1} parent=5 // pred_region
        %s269 = ssub.s32 %s14, 1
        // Predicated region
        $region45: #{controller_v4_forward.1} parent=43 // pred_check
          %p270 = pneg %p87
        $region46: #{controller_v4_forward.1} parent=43 // pred_check_branch
          %272 = sbr.rel (%p270) target = $region48
        $region47: #{controller_v4_forward.1} parent=43 // pred_region
          %274 = dma.done [#allocation3], 256
        $region48: #{controller_v4_forward.1} parent=43 // pred_fallthru
          _
        // Predicated region
        $region49: #{controller_v4_forward.1} parent=43 // pred_check
          %p275 = pneg %p108
        $region50: #{controller_v4_forward.1} parent=43 // pred_check_branch
          %277 = sbr.rel (%p275) target = $region52
        $region51: #{controller_v4_forward.1} parent=43 // pred_region
          %279 = dma.done [#allocation5], 512
        $region52: #{controller_v4_forward.1} parent=43 // pred_fallthru
          _
        %s280 = smul.u32 4, %s19
        %s281 = ssub.s32 7, %s280
        %p282 = scmp.lt.s32.totalorder %s281, 4
        %s283 = scalar_select %p282, %s281, 4
        %s284 = smul.u32 8, %s283
        %p285 = scmp.lt.s32.totalorder %s280, 6
        %s286 = scalar_select %p285, %s280, 6
        %s287 = smul.addr %s286, 8
        %s288 = scalar_lea.vmem %s0, %s287
        %p289 = pneg %p40
        %p290 = pneg %p37
        %s291 = smul.u32 4, %s19
        %s292 = ssub.s32 7, %s291
        %p293 = scmp.lt.s32.totalorder %s292, 4
        %s294 = scalar_select %p293, %s292, 4
        %s295 = smul.u32 8, %s294
        %p296 = scmp.lt.s32.totalorder %s291, 6
        %s297 = scalar_select %p296, %s291, 6
        %s298 = smul.addr %s297, 8
        %s299 = scalar_lea.vmem %s1, %s298
        %p300 = pneg %p66
        %p301 = pneg %p63
        %p302 = pneg %p87
        %p303 = pneg %p84
        %p304 = pneg %p108
        %p305 = pneg %p105
        %p306 = pneg %p129
        %p307 = pneg %p126
        %p308 = pneg %p150
        %p309 = pneg %p147
        %p310 = pneg %p176
        %p311 = pneg %p173
        %s312 = sand.u32 %s163, 1
        %s313 = sand.u32 %s163, 1
        %s314 = smul.addr %s313, 32
        %s315 = scalar_lea.vmem [#allocation6], %s314
        %s316 = smul.u32 4, %s19
        %s317 = ssub.s32 7, %s316
        %p318 = scmp.lt.s32.totalorder %s317, 4
        %s319 = scalar_select %p318, %s317, 4
        %s320 = smul.u32 8, %s319
        %p321 = scmp.lt.s32.totalorder %s316, 6
        %s322 = scalar_select %p321, %s316, 6
        %s323 = smul.addr %s322, 8
        %s324 = scalar_lea.vmem %s0, %s323
        %s325 = smul.u32 4, %s19
        %s326 = ssub.s32 7, %s325
        %p327 = scmp.lt.s32.totalorder %s326, 4
        %s328 = scalar_select %p327, %s326, 4
        %s329 = smul.u32 8, %s328
        %s330 = smul.u32 4, %s19
        %s331 = ssub.s32 7, %s330
        %p332 = scmp.lt.s32.totalorder %s331, 4
        %s333 = scalar_select %p332, %s331, 4
        %s334 = smul.u32 8, %s333
        %p335 = scmp.lt.s32.totalorder %s330, 6
        %s336 = scalar_select %p335, %s330, 6
        %s337 = smul.addr %s336, 8
        %s338 = scalar_lea.vmem %s1, %s337
        %s339 = smul.u32 4, %s19
        %s340 = ssub.s32 7, %s339
        %p341 = scmp.lt.s32.totalorder %s340, 4
        %s342 = scalar_select %p341, %s340, 4
        %s343 = smul.u32 8, %s342
        %s344 = smul.u32 4, %s19
        %s345 = ssub.s32 7, %s344
        %p346 = scmp.lt.s32.totalorder %s345, 4
        %s347 = scalar_select %p346, %s345, 4
        %s348 = smul.u32 8, %s347
        %v349 = vld [vmem:[%s324] sm:$0xff]
        %v350 = vld [vmem:[%s324 + $0x8] sm:$0xff]
        %v351 = vld [vmem:[%s324 + $0x10] sm:$0xff]
        %v352 = vld [vmem:[%s324 + $0x18] sm:$0xff]
        %v353 = vld [vmem:[#allocation2] sm:$0xff]
        %v354 = vld [vmem:[#allocation2 + $0x8] sm:$0xff]
        %v355 = vld [vmem:[%s338] sm:$0xff]
        %v356 = vld [vmem:[%s338 + $0x8] sm:$0xff]
        %v357 = vld [vmem:[%s338 + $0x10] sm:$0xff]
        %v358 = vld [vmem:[%s338 + $0x18] sm:$0xff]
        %v359 = vld [vmem:[#allocation4] sm:$0xff]
        %v360 = vld [vmem:[#allocation4 + $0x8] sm:$0xff]
        %v361 = vld [vmem:[#allocation4 + $0x10] sm:$0xff]
        %v362 = vld [vmem:[#allocation4 + $0x18] sm:$0xff]
        %vm363 = vcmask 261120
        %v365 = vsel %vm363, %v355, 0
        %v368 = vsel %vm363, %v356, 0
        %v371 = vsel %vm363, %v357, 0
        %v374 = vsel %vm363, %v358, 0
        %376 = vmatpush.msra.mxu0 0.0
        %377 = vmatpush.msra.mxu0 0.0
        %378 = vmatpush.msra.mxu0 0.0
        %379 = vmatpush.msra.mxu0 0.0
        %380 = vmatpush.msra.mxu0 0.0
        %381 = vmatpush.msra.mxu0 0.0
        %382 = vmatpush.msra.mxu0 0.0
        %383 = vmatpush.msra.mxu0 0.0
        %384 = vmatpush.msra.mxu0 0.0
        %385 = vmatpush.msra.mxu0 0.0
        %386 = vmatpush.msra.mxu0 0.0
        %387 = vmatpush.msra.mxu0 0.0
        %v388 = vand.u32 %v362, 4294901760
        %389 = vmatpush.msra.mxu0 %v388
        %v390 = vand.u32 %v361, 4294901760
        %391 = vmatpush.msra.mxu0 %v390
        %v392 = vand.u32 %v360, 4294901760
        %393 = vmatpush.msra.mxu0 %v392
        %v394 = vand.u32 %v359, 4294901760
        %395 = vmatpush.msra.mxu0 %v394
        %v396 = vand.u32 %v365, 4294901760
        %v397 = vsub.f32 %v365, %v396
        %v398 = vand.u32 %v397, 4294901760
        %v399 = vsub.f32 %v397, %v398
        %v400 = vand.u32 %v399, 4294901760
        %401 = vmatmul.f32.gmra.mxu0 %v400
        %v402 = vpop.f32.mrf.mxu0
        %v403 = vadd.f32 0.0, %v402
        %v404 = vand.u32 %v368, 4294901760
        %v405 = vsub.f32 %v368, %v404
        %v406 = vand.u32 %v405, 4294901760
        %v407 = vsub.f32 %v405, %v406
        %v408 = vand.u32 %v407, 4294901760
        %409 = vmatmul.f32.gmra.mxu0 %v408
        %v410 = vpop.f32.mrf.mxu0
        %v411 = vadd.f32 0.0, %v410
        %v412 = vand.u32 %v371, 4294901760
        %v413 = vsub.f32 %v371, %v412
        %v414 = vand.u32 %v413, 4294901760
        %v415 = vsub.f32 %v413, %v414
        %v416 = vand.u32 %v415, 4294901760
        %417 = vmatmul.f32.gmra.mxu0 %v416
        %v418 = vpop.f32.mrf.mxu0
        %v419 = vadd.f32 0.0, %v418
        %v420 = vand.u32 %v374, 4294901760
        %v421 = vsub.f32 %v374, %v420
        %v422 = vand.u32 %v421, 4294901760
        %v423 = vsub.f32 %v421, %v422
        %v424 = vand.u32 %v423, 4294901760
        %425 = vmatmul.f32.gmra.mxu0 %v424
        %v426 = vpop.f32.mrf.mxu0
        %v427 = vadd.f32 0.0, %v426
        %428 = vdwg.mxu0
        %429 = vmatpush.msra.mxu0 0.0
        %430 = vmatpush.msra.mxu0 0.0
        %431 = vmatpush.msra.mxu0 0.0
        %432 = vmatpush.msra.mxu0 0.0
        %433 = vmatpush.msra.mxu0 0.0
        %434 = vmatpush.msra.mxu0 0.0
        %435 = vmatpush.msra.mxu0 0.0
        %436 = vmatpush.msra.mxu0 0.0
        %437 = vmatpush.msra.mxu0 0.0
        %438 = vmatpush.msra.mxu0 0.0
        %439 = vmatpush.msra.mxu0 0.0
        %440 = vmatpush.msra.mxu0 0.0
        %v441 = vand.u32 %v362, 4294901760
        %v442 = vsub.f32 %v362, %v441
        %v443 = vand.u32 %v442, 4294901760
        %v444 = vsub.f32 %v442, %v443
        %v445 = vand.u32 %v444, 4294901760
        %446 = vmatpush.msra.mxu0 %v445
        %v447 = vand.u32 %v361, 4294901760
        %v448 = vsub.f32 %v361, %v447
        %v449 = vand.u32 %v448, 4294901760
        %v450 = vsub.f32 %v448, %v449
        %v451 = vand.u32 %v450, 4294901760
        %452 = vmatpush.msra.mxu0 %v451
        %v453 = vand.u32 %v360, 4294901760
        %v454 = vsub.f32 %v360, %v453
        %v455 = vand.u32 %v454, 4294901760
        %v456 = vsub.f32 %v454, %v455
        %v457 = vand.u32 %v456, 4294901760
        %458 = vmatpush.msra.mxu0 %v457
        %v459 = vand.u32 %v359, 4294901760
        %v460 = vsub.f32 %v359, %v459
        %v461 = vand.u32 %v460, 4294901760
        %v462 = vsub.f32 %v460, %v461
        %v463 = vand.u32 %v462, 4294901760
        %464 = vmatpush.msra.mxu0 %v463
        %v465 = vand.u32 %v365, 4294901760
        %466 = vmatmul.f32.gmra.mxu0 %v465
        %v467 = vpop.f32.mrf.mxu0
        %v468 = vadd.f32 %v403, %v467
        %v469 = vand.u32 %v368, 4294901760
        %470 = vmatmul.f32.gmra.mxu0 %v469
        %v471 = vpop.f32.mrf.mxu0
        %v472 = vadd.f32 %v411, %v471
        %v473 = vand.u32 %v371, 4294901760
        %474 = vmatmul.f32.gmra.mxu0 %v473
        %v475 = vpop.f32.mrf.mxu0
        %v476 = vadd.f32 %v419, %v475
        %v477 = vand.u32 %v374, 4294901760
        %478 = vmatmul.f32.gmra.mxu0 %v477
        %v479 = vpop.f32.mrf.mxu0
        %v480 = vadd.f32 %v427, %v479
        %481 = vdwg.mxu0
        %482 = vmatpush.msra.mxu0 0.0
        %483 = vmatpush.msra.mxu0 0.0
        %484 = vmatpush.msra.mxu0 0.0
        %485 = vmatpush.msra.mxu0 0.0
        %486 = vmatpush.msra.mxu0 0.0
        %487 = vmatpush.msra.mxu0 0.0
        %488 = vmatpush.msra.mxu0 0.0
        %489 = vmatpush.msra.mxu0 0.0
        %490 = vmatpush.msra.mxu0 0.0
        %491 = vmatpush.msra.mxu0 0.0
        %492 = vmatpush.msra.mxu0 0.0
        %493 = vmatpush.msra.mxu0 0.0
        %v494 = vand.u32 %v362, 4294901760
        %v495 = vsub.f32 %v362, %v494
        %496 = vmatpush.msra.mxu0 %v495
        %v497 = vand.u32 %v361, 4294901760
        %v498 = vsub.f32 %v361, %v497
        %499 = vmatpush.msra.mxu0 %v498
        %v500 = vand.u32 %v360, 4294901760
        %v501 = vsub.f32 %v360, %v500
        %502 = vmatpush.msra.mxu0 %v501
        %v503 = vand.u32 %v359, 4294901760
        %v504 = vsub.f32 %v359, %v503
        %505 = vmatpush.msra.mxu0 %v504
        %v506 = vand.u32 %v365, 4294901760
        %v507 = vsub.f32 %v365, %v506
        %508 = vmatmul.f32.gmra.mxu0 %v507
        %v509 = vpop.f32.mrf.mxu0
        %v510 = vadd.f32 %v468, %v509
        %v511 = vand.u32 %v368, 4294901760
        %v512 = vsub.f32 %v368, %v511
        %513 = vmatmul.f32.gmra.mxu0 %v512
        %v514 = vpop.f32.mrf.mxu0
        %v515 = vadd.f32 %v472, %v514
        %v516 = vand.u32 %v371, 4294901760
        %v517 = vsub.f32 %v371, %v516
        %518 = vmatmul.f32.gmra.mxu0 %v517
        %v519 = vpop.f32.mrf.mxu0
        %v520 = vadd.f32 %v476, %v519
        %v521 = vand.u32 %v374, 4294901760
        %v522 = vsub.f32 %v374, %v521
        %523 = vmatmul.f32.gmra.mxu0 %v522
        %v524 = vpop.f32.mrf.mxu0
        %v525 = vadd.f32 %v480, %v524
        %526 = vdwg.mxu0
        %527 = vmatpush.msra.mxu0 0.0
        %528 = vmatpush.msra.mxu0 0.0
        %529 = vmatpush.msra.mxu0 0.0
        %530 = vmatpush.msra.mxu0 0.0
        %531 = vmatpush.msra.mxu0 0.0
        %532 = vmatpush.msra.mxu0 0.0
        %533 = vmatpush.msra.mxu0 0.0
        %534 = vmatpush.msra.mxu0 0.0
        %535 = vmatpush.msra.mxu0 0.0
        %536 = vmatpush.msra.mxu0 0.0
        %537 = vmatpush.msra.mxu0 0.0
        %538 = vmatpush.msra.mxu0 0.0
        %v539 = vand.u32 %v362, 4294901760
        %540 = vmatpush.msra.mxu0 %v539
        %v541 = vand.u32 %v361, 4294901760
        %542 = vmatpush.msra.mxu0 %v541
        %v543 = vand.u32 %v360, 4294901760
        %544 = vmatpush.msra.mxu0 %v543
        %v545 = vand.u32 %v359, 4294901760
        %546 = vmatpush.msra.mxu0 %v545
        %v547 = vand.u32 %v365, 4294901760
        %v548 = vsub.f32 %v365, %v547
        %v549 = vand.u32 %v548, 4294901760
        %550 = vmatmul.f32.gmra.mxu0 %v549
        %v551 = vpop.f32.mrf.mxu0
        %v552 = vadd.f32 %v510, %v551
        %v553 = vand.u32 %v368, 4294901760
        %v554 = vsub.f32 %v368, %v553
        %v555 = vand.u32 %v554, 4294901760
        %556 = vmatmul.f32.gmra.mxu0 %v555
        %v557 = vpop.f32.mrf.mxu0
        %v558 = vadd.f32 %v515, %v557
        %v559 = vand.u32 %v371, 4294901760
        %v560 = vsub.f32 %v371, %v559
        %v561 = vand.u32 %v560, 4294901760
        %562 = vmatmul.f32.gmra.mxu0 %v561
        %v563 = vpop.f32.mrf.mxu0
        %v564 = vadd.f32 %v520, %v563
        %v565 = vand.u32 %v374, 4294901760
        %v566 = vsub.f32 %v374, %v565
        %v567 = vand.u32 %v566, 4294901760
        %568 = vmatmul.f32.gmra.mxu0 %v567
        %v569 = vpop.f32.mrf.mxu0
        %v570 = vadd.f32 %v525, %v569
        %571 = vdwg.mxu0
        %572 = vmatpush.msra.mxu0 0.0
        %573 = vmatpush.msra.mxu0 0.0
        %574 = vmatpush.msra.mxu0 0.0
        %575 = vmatpush.msra.mxu0 0.0
        %576 = vmatpush.msra.mxu0 0.0
        %577 = vmatpush.msra.mxu0 0.0
        %578 = vmatpush.msra.mxu0 0.0
        %579 = vmatpush.msra.mxu0 0.0
        %580 = vmatpush.msra.mxu0 0.0
        %581 = vmatpush.msra.mxu0 0.0
        %582 = vmatpush.msra.mxu0 0.0
        %583 = vmatpush.msra.mxu0 0.0
        %v584 = vand.u32 %v362, 4294901760
        %v585 = vsub.f32 %v362, %v584
        %v586 = vand.u32 %v585, 4294901760
        %587 = vmatpush.msra.mxu0 %v586
        %v588 = vand.u32 %v361, 4294901760
        %v589 = vsub.f32 %v361, %v588
        %v590 = vand.u32 %v589, 4294901760
        %591 = vmatpush.msra.mxu0 %v590
        %v592 = vand.u32 %v360, 4294901760
        %v593 = vsub.f32 %v360, %v592
        %v594 = vand.u32 %v593, 4294901760
        %595 = vmatpush.msra.mxu0 %v594
        %v596 = vand.u32 %v359, 4294901760
        %v597 = vsub.f32 %v359, %v596
        %v598 = vand.u32 %v597, 4294901760
        %599 = vmatpush.msra.mxu0 %v598
        %v600 = vand.u32 %v365, 4294901760
        %601 = vmatmul.f32.gmra.mxu0 %v600
        %v602 = vpop.f32.mrf.mxu0
        %v603 = vadd.f32 %v552, %v602
        %v604 = vand.u32 %v368, 4294901760
        %605 = vmatmul.f32.gmra.mxu0 %v604
        %v606 = vpop.f32.mrf.mxu0
        %v607 = vadd.f32 %v558, %v606
        %v608 = vand.u32 %v371, 4294901760
        %609 = vmatmul.f32.gmra.mxu0 %v608
        %v610 = vpop.f32.mrf.mxu0
        %v611 = vadd.f32 %v564, %v610
        %v612 = vand.u32 %v374, 4294901760
        %613 = vmatmul.f32.gmra.mxu0 %v612
        %v614 = vpop.f32.mrf.mxu0
        %v615 = vadd.f32 %v570, %v614
        %616 = vdwg.mxu0
        %617 = vmatpush.msra.mxu0 0.0
        %618 = vmatpush.msra.mxu0 0.0
        %619 = vmatpush.msra.mxu0 0.0
        %620 = vmatpush.msra.mxu0 0.0
        %621 = vmatpush.msra.mxu0 0.0
        %622 = vmatpush.msra.mxu0 0.0
        %623 = vmatpush.msra.mxu0 0.0
        %624 = vmatpush.msra.mxu0 0.0
        %625 = vmatpush.msra.mxu0 0.0
        %626 = vmatpush.msra.mxu0 0.0
        %627 = vmatpush.msra.mxu0 0.0
        %628 = vmatpush.msra.mxu0 0.0
        %v629 = vand.u32 %v362, 4294901760
        %630 = vmatpush.msra.mxu0 %v629
        %v631 = vand.u32 %v361, 4294901760
        %632 = vmatpush.msra.mxu0 %v631
        %v633 = vand.u32 %v360, 4294901760
        %634 = vmatpush.msra.mxu0 %v633
        %v635 = vand.u32 %v359, 4294901760
        %636 = vmatpush.msra.mxu0 %v635
        %v637 = vand.u32 %v365, 4294901760
        %638 = vmatmul.f32.gmra.mxu0 %v637
        %v639 = vpop.f32.mrf.mxu0
        %v640 = vadd.f32 %v603, %v639
        %v641 = vand.u32 %v368, 4294901760
        %642 = vmatmul.f32.gmra.mxu0 %v641
        %v643 = vpop.f32.mrf.mxu0
        %v644 = vadd.f32 %v607, %v643
        %v645 = vand.u32 %v371, 4294901760
        %646 = vmatmul.f32.gmra.mxu0 %v645
        %v647 = vpop.f32.mrf.mxu0
        %v648 = vadd.f32 %v611, %v647
        %v649 = vand.u32 %v374, 4294901760
        %650 = vmatmul.f32.gmra.mxu0 %v649
        %v651 = vpop.f32.mrf.mxu0
        %v652 = vadd.f32 %v615, %v651
        %653 = vdwg.mxu0
        %vm654 = vcmask 130048
        %v656 = vsel %vm654, %v349, 0
        %v659 = vsel %vm654, %v350, 0
        %v662 = vsel %vm654, %v351, 0
        %v665 = vsel %vm654, %v352, 0
        %667 = vmatpush.msra.mxu0 0.0
        %668 = vmatpush.msra.mxu0 0.0
        %669 = vmatpush.msra.mxu0 0.0
        %670 = vmatpush.msra.mxu0 0.0
        %671 = vmatpush.msra.mxu0 0.0
        %672 = vmatpush.msra.mxu0 0.0
        %673 = vmatpush.msra.mxu0 0.0
        %674 = vmatpush.msra.mxu0 0.0
        %675 = vmatpush.msra.mxu0 0.0
        %676 = vmatpush.msra.mxu0 0.0
        %677 = vmatpush.msra.mxu0 0.0
        %678 = vmatpush.msra.mxu0 0.0
        %679 = vmatpush.msra.mxu0 0.0
        %680 = vmatpush.msra.mxu0 0.0
        %v681 = vand.u32 %v354, 4294901760
        %682 = vmatpush.msra.mxu0 %v681
        %v683 = vand.u32 %v353, 4294901760
        %684 = vmatpush.msra.mxu0 %v683
        %v685 = vand.u32 %v656, 4294901760
        %v686 = vsub.f32 %v656, %v685
        %v687 = vand.u32 %v686, 4294901760
        %v688 = vsub.f32 %v686, %v687
        %v689 = vand.u32 %v688, 4294901760
        %690 = vmatmul.f32.gmra.mxu0 %v689
        %v691 = vpop.f32.mrf.mxu0
        %v692 = vadd.f32 %v640, %v691
        %v693 = vand.u32 %v659, 4294901760
        %v694 = vsub.f32 %v659, %v693
        %v695 = vand.u32 %v694, 4294901760
        %v696 = vsub.f32 %v694, %v695
        %v697 = vand.u32 %v696, 4294901760
        %698 = vmatmul.f32.gmra.mxu0 %v697
        %v699 = vpop.f32.mrf.mxu0
        %v700 = vadd.f32 %v644, %v699
        %v701 = vand.u32 %v662, 4294901760
        %v702 = vsub.f32 %v662, %v701
        %v703 = vand.u32 %v702, 4294901760
        %v704 = vsub.f32 %v702, %v703
        %v705 = vand.u32 %v704, 4294901760
        %706 = vmatmul.f32.gmra.mxu0 %v705
        %v707 = vpop.f32.mrf.mxu0
        %v708 = vadd.f32 %v648, %v707
        %v709 = vand.u32 %v665, 4294901760
        %v710 = vsub.f32 %v665, %v709
        %v711 = vand.u32 %v710, 4294901760
        %v712 = vsub.f32 %v710, %v711
        %v713 = vand.u32 %v712, 4294901760
        %714 = vmatmul.f32.gmra.mxu0 %v713
        %v715 = vpop.f32.mrf.mxu0
        %v716 = vadd.f32 %v652, %v715
        %717 = vdwg.mxu0
        %718 = vmatpush.msra.mxu0 0.0
        %719 = vmatpush.msra.mxu0 0.0
        %720 = vmatpush.msra.mxu0 0.0
        %721 = vmatpush.msra.mxu0 0.0
        %722 = vmatpush.msra.mxu0 0.0
        %723 = vmatpush.msra.mxu0 0.0
        %724 = vmatpush.msra.mxu0 0.0
        %725 = vmatpush.msra.mxu0 0.0
        %726 = vmatpush.msra.mxu0 0.0
        %727 = vmatpush.msra.mxu0 0.0
        %728 = vmatpush.msra.mxu0 0.0
        %729 = vmatpush.msra.mxu0 0.0
        %730 = vmatpush.msra.mxu0 0.0
        %731 = vmatpush.msra.mxu0 0.0
        %v732 = vand.u32 %v354, 4294901760
        %v733 = vsub.f32 %v354, %v732
        %v734 = vand.u32 %v733, 4294901760
        %v735 = vsub.f32 %v733, %v734
        %v736 = vand.u32 %v735, 4294901760
        %737 = vmatpush.msra.mxu0 %v736
        %v738 = vand.u32 %v353, 4294901760
        %v739 = vsub.f32 %v353, %v738
        %v740 = vand.u32 %v739, 4294901760
        %v741 = vsub.f32 %v739, %v740
        %v742 = vand.u32 %v741, 4294901760
        %743 = vmatpush.msra.mxu0 %v742
        %v744 = vand.u32 %v656, 4294901760
        %745 = vmatmul.f32.gmra.mxu0 %v744
        %v746 = vpop.f32.mrf.mxu0
        %v747 = vadd.f32 %v692, %v746
        %v748 = vand.u32 %v659, 4294901760
        %749 = vmatmul.f32.gmra.mxu0 %v748
        %v750 = vpop.f32.mrf.mxu0
        %v751 = vadd.f32 %v700, %v750
        %v752 = vand.u32 %v662, 4294901760
        %753 = vmatmul.f32.gmra.mxu0 %v752
        %v754 = vpop.f32.mrf.mxu0
        %v755 = vadd.f32 %v708, %v754
        %v756 = vand.u32 %v665, 4294901760
        %757 = vmatmul.f32.gmra.mxu0 %v756
        %v758 = vpop.f32.mrf.mxu0
        %v759 = vadd.f32 %v716, %v758
        %760 = vdwg.mxu0
        %761 = vmatpush.msra.mxu0 0.0
        %762 = vmatpush.msra.mxu0 0.0
        %763 = vmatpush.msra.mxu0 0.0
        %764 = vmatpush.msra.mxu0 0.0
        %765 = vmatpush.msra.mxu0 0.0
        %766 = vmatpush.msra.mxu0 0.0
        %767 = vmatpush.msra.mxu0 0.0
        %768 = vmatpush.msra.mxu0 0.0
        %769 = vmatpush.msra.mxu0 0.0
        %770 = vmatpush.msra.mxu0 0.0
        %771 = vmatpush.msra.mxu0 0.0
        %772 = vmatpush.msra.mxu0 0.0
        %773 = vmatpush.msra.mxu0 0.0
        %774 = vmatpush.msra.mxu0 0.0
        %v775 = vand.u32 %v354, 4294901760
        %v776 = vsub.f32 %v354, %v775
        %777 = vmatpush.msra.mxu0 %v776
        %v778 = vand.u32 %v353, 4294901760
        %v779 = vsub.f32 %v353, %v778
        %780 = vmatpush.msra.mxu0 %v779
        %v781 = vand.u32 %v656, 4294901760
        %v782 = vsub.f32 %v656, %v781
        %783 = vmatmul.f32.gmra.mxu0 %v782
        %v784 = vpop.f32.mrf.mxu0
        %v785 = vadd.f32 %v747, %v784
        %v786 = vand.u32 %v659, 4294901760
        %v787 = vsub.f32 %v659, %v786
        %788 = vmatmul.f32.gmra.mxu0 %v787
        %v789 = vpop.f32.mrf.mxu0
        %v790 = vadd.f32 %v751, %v789
        %v791 = vand.u32 %v662, 4294901760
        %v792 = vsub.f32 %v662, %v791
        %793 = vmatmul.f32.gmra.mxu0 %v792
        %v794 = vpop.f32.mrf.mxu0
        %v795 = vadd.f32 %v755, %v794
        %v796 = vand.u32 %v665, 4294901760
        %v797 = vsub.f32 %v665, %v796
        %798 = vmatmul.f32.gmra.mxu0 %v797
        %v799 = vpop.f32.mrf.mxu0
        %v800 = vadd.f32 %v759, %v799
        %801 = vdwg.mxu0
        %802 = vmatpush.msra.mxu0 0.0
        %803 = vmatpush.msra.mxu0 0.0
        %804 = vmatpush.msra.mxu0 0.0
        %805 = vmatpush.msra.mxu0 0.0
        %806 = vmatpush.msra.mxu0 0.0
        %807 = vmatpush.msra.mxu0 0.0
        %808 = vmatpush.msra.mxu0 0.0
        %809 = vmatpush.msra.mxu0 0.0
        %810 = vmatpush.msra.mxu0 0.0
        %811 = vmatpush.msra.mxu0 0.0
        %812 = vmatpush.msra.mxu0 0.0
        %813 = vmatpush.msra.mxu0 0.0
        %814 = vmatpush.msra.mxu0 0.0
        %815 = vmatpush.msra.mxu0 0.0
        %v816 = vand.u32 %v354, 4294901760
        %817 = vmatpush.msra.mxu0 %v816
        %v818 = vand.u32 %v353, 4294901760
        %819 = vmatpush.msra.mxu0 %v818
        %v820 = vand.u32 %v656, 4294901760
        %v821 = vsub.f32 %v656, %v820
        %v822 = vand.u32 %v821, 4294901760
        %823 = vmatmul.f32.gmra.mxu0 %v822
        %v824 = vpop.f32.mrf.mxu0
        %v825 = vadd.f32 %v785, %v824
        %v826 = vand.u32 %v659, 4294901760
        %v827 = vsub.f32 %v659, %v826
        %v828 = vand.u32 %v827, 4294901760
        %829 = vmatmul.f32.gmra.mxu0 %v828
        %v830 = vpop.f32.mrf.mxu0
        %v831 = vadd.f32 %v790, %v830
        %v832 = vand.u32 %v662, 4294901760
        %v833 = vsub.f32 %v662, %v832
        %v834 = vand.u32 %v833, 4294901760
        %835 = vmatmul.f32.gmra.mxu0 %v834
        %v836 = vpop.f32.mrf.mxu0
        %v837 = vadd.f32 %v795, %v836
        %v838 = vand.u32 %v665, 4294901760
        %v839 = vsub.f32 %v665, %v838
        %v840 = vand.u32 %v839, 4294901760
        %841 = vmatmul.f32.gmra.mxu0 %v840
        %v842 = vpop.f32.mrf.mxu0
        %v843 = vadd.f32 %v800, %v842
        %844 = vdwg.mxu0
        %845 = vmatpush.msra.mxu0 0.0
        %846 = vmatpush.msra.mxu0 0.0
        %847 = vmatpush.msra.mxu0 0.0
        %848 = vmatpush.msra.mxu0 0.0
        %849 = vmatpush.msra.mxu0 0.0
        %850 = vmatpush.msra.mxu0 0.0
        %851 = vmatpush.msra.mxu0 0.0
        %852 = vmatpush.msra.mxu0 0.0
        %853 = vmatpush.msra.mxu0 0.0
        %854 = vmatpush.msra.mxu0 0.0
        %855 = vmatpush.msra.mxu0 0.0
        %856 = vmatpush.msra.mxu0 0.0
        %857 = vmatpush.msra.mxu0 0.0
        %858 = vmatpush.msra.mxu0 0.0
        %v859 = vand.u32 %v354, 4294901760
        %v860 = vsub.f32 %v354, %v859
        %v861 = vand.u32 %v860, 4294901760
        %862 = vmatpush.msra.mxu0 %v861
        %v863 = vand.u32 %v353, 4294901760
        %v864 = vsub.f32 %v353, %v863
        %v865 = vand.u32 %v864, 4294901760
        %866 = vmatpush.msra.mxu0 %v865
        %v867 = vand.u32 %v656, 4294901760
        %868 = vmatmul.f32.gmra.mxu0 %v867
        %v869 = vpop.f32.mrf.mxu0
        %v870 = vadd.f32 %v825, %v869
        %v871 = vand.u32 %v659, 4294901760
        %872 = vmatmul.f32.gmra.mxu0 %v871
        %v873 = vpop.f32.mrf.mxu0
        %v874 = vadd.f32 %v831, %v873
        %v875 = vand.u32 %v662, 4294901760
        %876 = vmatmul.f32.gmra.mxu0 %v875
        %v877 = vpop.f32.mrf.mxu0
        %v878 = vadd.f32 %v837, %v877
        %v879 = vand.u32 %v665, 4294901760
        %880 = vmatmul.f32.gmra.mxu0 %v879
        %v881 = vpop.f32.mrf.mxu0
        %v882 = vadd.f32 %v843, %v881
        %883 = vdwg.mxu0
        %884 = vmatpush.msra.mxu0 0.0
        %885 = vmatpush.msra.mxu0 0.0
        %886 = vmatpush.msra.mxu0 0.0
        %887 = vmatpush.msra.mxu0 0.0
        %888 = vmatpush.msra.mxu0 0.0
        %889 = vmatpush.msra.mxu0 0.0
        %890 = vmatpush.msra.mxu0 0.0
        %891 = vmatpush.msra.mxu0 0.0
        %892 = vmatpush.msra.mxu0 0.0
        %893 = vmatpush.msra.mxu0 0.0
        %894 = vmatpush.msra.mxu0 0.0
        %895 = vmatpush.msra.mxu0 0.0
        %896 = vmatpush.msra.mxu0 0.0
        %897 = vmatpush.msra.mxu0 0.0
        %v898 = vand.u32 %v354, 4294901760
        %899 = vmatpush.msra.mxu0 %v898
        %v900 = vand.u32 %v353, 4294901760
        %901 = vmatpush.msra.mxu0 %v900
        %v902 = vand.u32 %v656, 4294901760
        %903 = vmatmul.f32.gmra.mxu0 %v902
        %v904 = vpop.f32.mrf.mxu0
        %v905 = vadd.f32 %v870, %v904
        %v906 = vand.u32 %v659, 4294901760
        %907 = vmatmul.f32.gmra.mxu0 %v906
        %v908 = vpop.f32.mrf.mxu0
        %v909 = vadd.f32 %v874, %v908
        %v910 = vand.u32 %v662, 4294901760
        %911 = vmatmul.f32.gmra.mxu0 %v910
        %v912 = vpop.f32.mrf.mxu0
        %v913 = vadd.f32 %v878, %v912
        %v914 = vand.u32 %v665, 4294901760
        %915 = vmatmul.f32.gmra.mxu0 %v914
        %v916 = vpop.f32.mrf.mxu0
        %v917 = vadd.f32 %v882, %v916
        %918 = vdwg.mxu0
        %v919 = vld [vmem:[%s4] sm:$0x1]
        %v921 = vperm.slane %v919, 0
        %v923 = vadd.f32 %v905, %v921
        %v924 = vadd.f32 %v909, %v921
        %v925 = vadd.f32 %v913, %v921
        %v926 = vadd.f32 %v917, %v921
        %v927 = vld [vmem:[%s5] sm:$0xff]
        %v928 = vld [vmem:[%s5 + $0x8] sm:$0xff]
        %v929 = vld [vmem:[%s5 + $0x10] sm:$0xff]
        %v930 = vld [vmem:[%s5 + $0x18] sm:$0xff]
        %v931 = vld [vmem:[%s5 + $0x20] sm:$0xff]
        %v932 = vld [vmem:[%s5 + $0x28] sm:$0xff]
        %v933 = vld [vmem:[%s5 + $0x30] sm:$0xff]
        %v934 = vld [vmem:[%s5 + $0x38] sm:$0xff]
        %v935 = vld [vmem:[%s5 + $0x40] sm:$0xff]
        %v936 = vld [vmem:[%s5 + $0x48] sm:$0xff]
        %v937 = vld [vmem:[%s5 + $0x50] sm:$0xff]
        %v938 = vld [vmem:[%s5 + $0x58] sm:$0xff]
        %v939 = vld [vmem:[%s5 + $0x60] sm:$0xff]
        %v940 = vld [vmem:[%s5 + $0x68] sm:$0xff]
        %v941 = vld [vmem:[%s5 + $0x70] sm:$0xff]
        %v942 = vld [vmem:[%s5 + $0x78] sm:$0xff]
        %v943 = vand.u32 %v942, 4294901760
        %944 = vmatpush.msra.mxu0 %v943
        %v945 = vand.u32 %v941, 4294901760
        %946 = vmatpush.msra.mxu0 %v945
        %v947 = vand.u32 %v940, 4294901760
        %948 = vmatpush.msra.mxu0 %v947
        %v949 = vand.u32 %v939, 4294901760
        %950 = vmatpush.msra.mxu0 %v949
        %v951 = vand.u32 %v938, 4294901760
        %952 = vmatpush.msra.mxu0 %v951
        %v953 = vand.u32 %v937, 4294901760
        %954 = vmatpush.msra.mxu0 %v953
        %v955 = vand.u32 %v936, 4294901760
        %956 = vmatpush.msra.mxu0 %v955
        %v957 = vand.u32 %v935, 4294901760
        %958 = vmatpush.msra.mxu0 %v957
        %v959 = vand.u32 %v934, 4294901760
        %960 = vmatpush.msra.mxu0 %v959
        %v961 = vand.u32 %v933, 4294901760
        %962 = vmatpush.msra.mxu0 %v961
        %v963 = vand.u32 %v932, 4294901760
        %964 = vmatpush.msra.mxu0 %v963
        %v965 = vand.u32 %v931, 4294901760
        %966 = vmatpush.msra.mxu0 %v965
        %v967 = vand.u32 %v930, 4294901760
        %968 = vmatpush.msra.mxu0 %v967
        %v969 = vand.u32 %v929, 4294901760
        %970 = vmatpush.msra.mxu0 %v969
        %v971 = vand.u32 %v928, 4294901760
        %972 = vmatpush.msra.mxu0 %v971
        %v973 = vand.u32 %v927, 4294901760
        %974 = vmatpush.msra.mxu0 %v973
        %v975 = vand.u32 %v923, 4294901760
        %v976 = vsub.f32 %v923, %v975
        %v977 = vand.u32 %v976, 4294901760
        %v978 = vsub.f32 %v976, %v977
        %v979 = vand.u32 %v978, 4294901760
        %980 = vmatmul.f32.gmra.mxu0 %v979
        %v981 = vpop.f32.mrf.mxu0
        %v982 = vadd.f32 0.0, %v981
        %v983 = vand.u32 %v924, 4294901760
        %v984 = vsub.f32 %v924, %v983
        %v985 = vand.u32 %v984, 4294901760
        %v986 = vsub.f32 %v984, %v985
        %v987 = vand.u32 %v986, 4294901760
        %988 = vmatmul.f32.gmra.mxu0 %v987
        %v989 = vpop.f32.mrf.mxu0
        %v990 = vadd.f32 0.0, %v989
        %v991 = vand.u32 %v925, 4294901760
        %v992 = vsub.f32 %v925, %v991
        %v993 = vand.u32 %v992, 4294901760
        %v994 = vsub.f32 %v992, %v993
        %v995 = vand.u32 %v994, 4294901760
        %996 = vmatmul.f32.gmra.mxu0 %v995
        %v997 = vpop.f32.mrf.mxu0
        %v998 = vadd.f32 0.0, %v997
        %v999 = vand.u32 %v926, 4294901760
        %v1000 = vsub.f32 %v926, %v999
        %v1001 = vand.u32 %v1000, 4294901760
        %v1002 = vsub.f32 %v1000, %v1001
        %v1003 = vand.u32 %v1002, 4294901760
        %1004 = vmatmul.f32.gmra.mxu0 %v1003
        %v1005 = vpop.f32.mrf.mxu0
        %v1006 = vadd.f32 0.0, %v1005
        %1007 = vdwg.mxu0
        %v1008 = vand.u32 %v942, 4294901760
        %v1009 = vsub.f32 %v942, %v1008
        %v1010 = vand.u32 %v1009, 4294901760
        %v1011 = vsub.f32 %v1009, %v1010
        %v1012 = vand.u32 %v1011, 4294901760
        %1013 = vmatpush.msra.mxu0 %v1012
        %v1014 = vand.u32 %v941, 4294901760
        %v1015 = vsub.f32 %v941, %v1014
        %v1016 = vand.u32 %v1015, 4294901760
        %v1017 = vsub.f32 %v1015, %v1016
        %v1018 = vand.u32 %v1017, 4294901760
        %1019 = vmatpush.msra.mxu0 %v1018
        %v1020 = vand.u32 %v940, 4294901760
        %v1021 = vsub.f32 %v940, %v1020
        %v1022 = vand.u32 %v1021, 4294901760
        %v1023 = vsub.f32 %v1021, %v1022
        %v1024 = vand.u32 %v1023, 4294901760
        %1025 = vmatpush.msra.mxu0 %v1024
        %v1026 = vand.u32 %v939, 4294901760
        %v1027 = vsub.f32 %v939, %v1026
        %v1028 = vand.u32 %v1027, 4294901760
        %v1029 = vsub.f32 %v1027, %v1028
        %v1030 = vand.u32 %v1029, 4294901760
        %1031 = vmatpush.msra.mxu0 %v1030
        %v1032 = vand.u32 %v938, 4294901760
        %v1033 = vsub.f32 %v938, %v1032
        %v1034 = vand.u32 %v1033, 4294901760
        %v1035 = vsub.f32 %v1033, %v1034
        %v1036 = vand.u32 %v1035, 4294901760
        %1037 = vmatpush.msra.mxu0 %v1036
        %v1038 = vand.u32 %v937, 4294901760
        %v1039 = vsub.f32 %v937, %v1038
        %v1040 = vand.u32 %v1039, 4294901760
        %v1041 = vsub.f32 %v1039, %v1040
        %v1042 = vand.u32 %v1041, 4294901760
        %1043 = vmatpush.msra.mxu0 %v1042
        %v1044 = vand.u32 %v936, 4294901760
        %v1045 = vsub.f32 %v936, %v1044
        %v1046 = vand.u32 %v1045, 4294901760
        %v1047 = vsub.f32 %v1045, %v1046
        %v1048 = vand.u32 %v1047, 4294901760
        %1049 = vmatpush.msra.mxu0 %v1048
        %v1050 = vand.u32 %v935, 4294901760
        %v1051 = vsub.f32 %v935, %v1050
        %v1052 = vand.u32 %v1051, 4294901760
        %v1053 = vsub.f32 %v1051, %v1052
        %v1054 = vand.u32 %v1053, 4294901760
        %1055 = vmatpush.msra.mxu0 %v1054
        %v1056 = vand.u32 %v934, 4294901760
        %v1057 = vsub.f32 %v934, %v1056
        %v1058 = vand.u32 %v1057, 4294901760
        %v1059 = vsub.f32 %v1057, %v1058
        %v1060 = vand.u32 %v1059, 4294901760
        %1061 = vmatpush.msra.mxu0 %v1060
        %v1062 = vand.u32 %v933, 4294901760
        %v1063 = vsub.f32 %v933, %v1062
        %v1064 = vand.u32 %v1063, 4294901760
        %v1065 = vsub.f32 %v1063, %v1064
        %v1066 = vand.u32 %v1065, 4294901760
        %1067 = vmatpush.msra.mxu0 %v1066
        %v1068 = vand.u32 %v932, 4294901760
        %v1069 = vsub.f32 %v932, %v1068
        %v1070 = vand.u32 %v1069, 4294901760
        %v1071 = vsub.f32 %v1069, %v1070
        %v1072 = vand.u32 %v1071, 4294901760
        %1073 = vmatpush.msra.mxu0 %v1072
        %v1074 = vand.u32 %v931, 4294901760
        %v1075 = vsub.f32 %v931, %v1074
        %v1076 = vand.u32 %v1075, 4294901760
        %v1077 = vsub.f32 %v1075, %v1076
        %v1078 = vand.u32 %v1077, 4294901760
        %1079 = vmatpush.msra.mxu0 %v1078
        %v1080 = vand.u32 %v930, 4294901760
        %v1081 = vsub.f32 %v930, %v1080
        %v1082 = vand.u32 %v1081, 4294901760
        %v1083 = vsub.f32 %v1081, %v1082
        %v1084 = vand.u32 %v1083, 4294901760
        %1085 = vmatpush.msra.mxu0 %v1084
        %v1086 = vand.u32 %v929, 4294901760
        %v1087 = vsub.f32 %v929, %v1086
        %v1088 = vand.u32 %v1087, 4294901760
        %v1089 = vsub.f32 %v1087, %v1088
        %v1090 = vand.u32 %v1089, 4294901760
        %1091 = vmatpush.msra.mxu0 %v1090
        %v1092 = vand.u32 %v928, 4294901760
        %v1093 = vsub.f32 %v928, %v1092
        %v1094 = vand.u32 %v1093, 4294901760
        %v1095 = vsub.f32 %v1093, %v1094
        %v1096 = vand.u32 %v1095, 4294901760
        %1097 = vmatpush.msra.mxu0 %v1096
        %v1098 = vand.u32 %v927, 4294901760
        %v1099 = vsub.f32 %v927, %v1098
        %v1100 = vand.u32 %v1099, 4294901760
        %v1101 = vsub.f32 %v1099, %v1100
        %v1102 = vand.u32 %v1101, 4294901760
        %1103 = vmatpush.msra.mxu0 %v1102
        %v1104 = vand.u32 %v923, 4294901760
        %1105 = vmatmul.f32.gmra.mxu0 %v1104
        %v1106 = vpop.f32.mrf.mxu0
        %v1107 = vadd.f32 %v982, %v1106
        %v1108 = vand.u32 %v924, 4294901760
        %1109 = vmatmul.f32.gmra.mxu0 %v1108
        %v1110 = vpop.f32.mrf.mxu0
        %v1111 = vadd.f32 %v990, %v1110
        %v1112 = vand.u32 %v925, 4294901760
        %1113 = vmatmul.f32.gmra.mxu0 %v1112
        %v1114 = vpop.f32.mrf.mxu0
        %v1115 = vadd.f32 %v998, %v1114
        %v1116 = vand.u32 %v926, 4294901760
        %1117 = vmatmul.f32.gmra.mxu0 %v1116
        %v1118 = vpop.f32.mrf.mxu0
        %v1119 = vadd.f32 %v1006, %v1118
        %1120 = vdwg.mxu0
        %v1121 = vand.u32 %v942, 4294901760
        %v1122 = vsub.f32 %v942, %v1121
        %1123 = vmatpush.msra.mxu0 %v1122
        %v1124 = vand.u32 %v941, 4294901760
        %v1125 = vsub.f32 %v941, %v1124
        %1126 = vmatpush.msra.mxu0 %v1125
        %v1127 = vand.u32 %v940, 4294901760
        %v1128 = vsub.f32 %v940, %v1127
        %1129 = vmatpush.msra.mxu0 %v1128
        %v1130 = vand.u32 %v939, 4294901760
        %v1131 = vsub.f32 %v939, %v1130
        %1132 = vmatpush.msra.mxu0 %v1131
        %v1133 = vand.u32 %v938, 4294901760
        %v1134 = vsub.f32 %v938, %v1133
        %1135 = vmatpush.msra.mxu0 %v1134
        %v1136 = vand.u32 %v937, 4294901760
        %v1137 = vsub.f32 %v937, %v1136
        %1138 = vmatpush.msra.mxu0 %v1137
        %v1139 = vand.u32 %v936, 4294901760
        %v1140 = vsub.f32 %v936, %v1139
        %1141 = vmatpush.msra.mxu0 %v1140
        %v1142 = vand.u32 %v935, 4294901760
        %v1143 = vsub.f32 %v935, %v1142
        %1144 = vmatpush.msra.mxu0 %v1143
        %v1145 = vand.u32 %v934, 4294901760
        %v1146 = vsub.f32 %v934, %v1145
        %1147 = vmatpush.msra.mxu0 %v1146
        %v1148 = vand.u32 %v933, 4294901760
        %v1149 = vsub.f32 %v933, %v1148
        %1150 = vmatpush.msra.mxu0 %v1149
        %v1151 = vand.u32 %v932, 4294901760
        %v1152 = vsub.f32 %v932, %v1151
        %1153 = vmatpush.msra.mxu0 %v1152
        %v1154 = vand.u32 %v931, 4294901760
        %v1155 = vsub.f32 %v931, %v1154
        %1156 = vmatpush.msra.mxu0 %v1155
        %v1157 = vand.u32 %v930, 4294901760
        %v1158 = vsub.f32 %v930, %v1157
        %1159 = vmatpush.msra.mxu0 %v1158
        %v1160 = vand.u32 %v929, 4294901760
        %v1161 = vsub.f32 %v929, %v1160
        %1162 = vmatpush.msra.mxu0 %v1161
        %v1163 = vand.u32 %v928, 4294901760
        %v1164 = vsub.f32 %v928, %v1163
        %1165 = vmatpush.msra.mxu0 %v1164
        %v1166 = vand.u32 %v927, 4294901760
        %v1167 = vsub.f32 %v927, %v1166
        %1168 = vmatpush.msra.mxu0 %v1167
        %v1169 = vand.u32 %v923, 4294901760
        %v1170 = vsub.f32 %v923, %v1169
        %1171 = vmatmul.f32.gmra.mxu0 %v1170
        %v1172 = vpop.f32.mrf.mxu0
        %v1173 = vadd.f32 %v1107, %v1172
        %v1174 = vand.u32 %v924, 4294901760
        %v1175 = vsub.f32 %v924, %v1174
        %1176 = vmatmul.f32.gmra.mxu0 %v1175
        %v1177 = vpop.f32.mrf.mxu0
        %v1178 = vadd.f32 %v1111, %v1177
        %v1179 = vand.u32 %v925, 4294901760
        %v1180 = vsub.f32 %v925, %v1179
        %1181 = vmatmul.f32.gmra.mxu0 %v1180
        %v1182 = vpop.f32.mrf.mxu0
        %v1183 = vadd.f32 %v1115, %v1182
        %v1184 = vand.u32 %v926, 4294901760
        %v1185 = vsub.f32 %v926, %v1184
        %1186 = vmatmul.f32.gmra.mxu0 %v1185
        %v1187 = vpop.f32.mrf.mxu0
        %v1188 = vadd.f32 %v1119, %v1187
        %1189 = vdwg.mxu0
        %v1190 = vand.u32 %v942, 4294901760
        %1191 = vmatpush.msra.mxu0 %v1190
        %v1192 = vand.u32 %v941, 4294901760
        %1193 = vmatpush.msra.mxu0 %v1192
        %v1194 = vand.u32 %v940, 4294901760
        %1195 = vmatpush.msra.mxu0 %v1194
        %v1196 = vand.u32 %v939, 4294901760
        %1197 = vmatpush.msra.mxu0 %v1196
        %v1198 = vand.u32 %v938, 4294901760
        %1199 = vmatpush.msra.mxu0 %v1198
        %v1200 = vand.u32 %v937, 4294901760
        %1201 = vmatpush.msra.mxu0 %v1200
        %v1202 = vand.u32 %v936, 4294901760
        %1203 = vmatpush.msra.mxu0 %v1202
        %v1204 = vand.u32 %v935, 4294901760
        %1205 = vmatpush.msra.mxu0 %v1204
        %v1206 = vand.u32 %v934, 4294901760
        %1207 = vmatpush.msra.mxu0 %v1206
        %v1208 = vand.u32 %v933, 4294901760
        %1209 = vmatpush.msra.mxu0 %v1208
        %v1210 = vand.u32 %v932, 4294901760
        %1211 = vmatpush.msra.mxu0 %v1210
        %v1212 = vand.u32 %v931, 4294901760
        %1213 = vmatpush.msra.mxu0 %v1212
        %v1214 = vand.u32 %v930, 4294901760
        %1215 = vmatpush.msra.mxu0 %v1214
        %v1216 = vand.u32 %v929, 4294901760
        %1217 = vmatpush.msra.mxu0 %v1216
        %v1218 = vand.u32 %v928, 4294901760
        %1219 = vmatpush.msra.mxu0 %v1218
        %v1220 = vand.u32 %v927, 4294901760
        %1221 = vmatpush.msra.mxu0 %v1220
        %v1222 = vand.u32 %v923, 4294901760
        %v1223 = vsub.f32 %v923, %v1222
        %v1224 = vand.u32 %v1223, 4294901760
        %1225 = vmatmul.f32.gmra.mxu0 %v1224
        %v1226 = vpop.f32.mrf.mxu0
        %v1227 = vadd.f32 %v1173, %v1226
        %v1228 = vand.u32 %v924, 4294901760
        %v1229 = vsub.f32 %v924, %v1228
        %v1230 = vand.u32 %v1229, 4294901760
        %1231 = vmatmul.f32.gmra.mxu0 %v1230
        %v1232 = vpop.f32.mrf.mxu0
        %v1233 = vadd.f32 %v1178, %v1232
        %v1234 = vand.u32 %v925, 4294901760
        %v1235 = vsub.f32 %v925, %v1234
        %v1236 = vand.u32 %v1235, 4294901760
        %1237 = vmatmul.f32.gmra.mxu0 %v1236
        %v1238 = vpop.f32.mrf.mxu0
        %v1239 = vadd.f32 %v1183, %v1238
        %v1240 = vand.u32 %v926, 4294901760
        %v1241 = vsub.f32 %v926, %v1240
        %v1242 = vand.u32 %v1241, 4294901760
        %1243 = vmatmul.f32.gmra.mxu0 %v1242
        %v1244 = vpop.f32.mrf.mxu0
        %v1245 = vadd.f32 %v1188, %v1244
        %1246 = vdwg.mxu0
        %v1247 = vand.u32 %v942, 4294901760
        %v1248 = vsub.f32 %v942, %v1247
        %v1249 = vand.u32 %v1248, 4294901760
        %1250 = vmatpush.msra.mxu0 %v1249
        %v1251 = vand.u32 %v941, 4294901760
        %v1252 = vsub.f32 %v941, %v1251
        %v1253 = vand.u32 %v1252, 4294901760
        %1254 = vmatpush.msra.mxu0 %v1253
        %v1255 = vand.u32 %v940, 4294901760
        %v1256 = vsub.f32 %v940, %v1255
        %v1257 = vand.u32 %v1256, 4294901760
        %1258 = vmatpush.msra.mxu0 %v1257
        %v1259 = vand.u32 %v939, 4294901760
        %v1260 = vsub.f32 %v939, %v1259
        %v1261 = vand.u32 %v1260, 4294901760
        %1262 = vmatpush.msra.mxu0 %v1261
        %v1263 = vand.u32 %v938, 4294901760
        %v1264 = vsub.f32 %v938, %v1263
        %v1265 = vand.u32 %v1264, 4294901760
        %1266 = vmatpush.msra.mxu0 %v1265
        %v1267 = vand.u32 %v937, 4294901760
        %v1268 = vsub.f32 %v937, %v1267
        %v1269 = vand.u32 %v1268, 4294901760
        %1270 = vmatpush.msra.mxu0 %v1269
        %v1271 = vand.u32 %v936, 4294901760
        %v1272 = vsub.f32 %v936, %v1271
        %v1273 = vand.u32 %v1272, 4294901760
        %1274 = vmatpush.msra.mxu0 %v1273
        %v1275 = vand.u32 %v935, 4294901760
        %v1276 = vsub.f32 %v935, %v1275
        %v1277 = vand.u32 %v1276, 4294901760
        %1278 = vmatpush.msra.mxu0 %v1277
        %v1279 = vand.u32 %v934, 4294901760
        %v1280 = vsub.f32 %v934, %v1279
        %v1281 = vand.u32 %v1280, 4294901760
        %1282 = vmatpush.msra.mxu0 %v1281
        %v1283 = vand.u32 %v933, 4294901760
        %v1284 = vsub.f32 %v933, %v1283
        %v1285 = vand.u32 %v1284, 4294901760
        %1286 = vmatpush.msra.mxu0 %v1285
        %v1287 = vand.u32 %v932, 4294901760
        %v1288 = vsub.f32 %v932, %v1287
        %v1289 = vand.u32 %v1288, 4294901760
        %1290 = vmatpush.msra.mxu0 %v1289
        %v1291 = vand.u32 %v931, 4294901760
        %v1292 = vsub.f32 %v931, %v1291
        %v1293 = vand.u32 %v1292, 4294901760
        %1294 = vmatpush.msra.mxu0 %v1293
        %v1295 = vand.u32 %v930, 4294901760
        %v1296 = vsub.f32 %v930, %v1295
        %v1297 = vand.u32 %v1296, 4294901760
        %1298 = vmatpush.msra.mxu0 %v1297
        %v1299 = vand.u32 %v929, 4294901760
        %v1300 = vsub.f32 %v929, %v1299
        %v1301 = vand.u32 %v1300, 4294901760
        %1302 = vmatpush.msra.mxu0 %v1301
        %v1303 = vand.u32 %v928, 4294901760
        %v1304 = vsub.f32 %v928, %v1303
        %v1305 = vand.u32 %v1304, 4294901760
        %1306 = vmatpush.msra.mxu0 %v1305
        %v1307 = vand.u32 %v927, 4294901760
        %v1308 = vsub.f32 %v927, %v1307
        %v1309 = vand.u32 %v1308, 4294901760
        %1310 = vmatpush.msra.mxu0 %v1309
        %v1311 = vand.u32 %v923, 4294901760
        %1312 = vmatmul.f32.gmra.mxu0 %v1311
        %v1313 = vpop.f32.mrf.mxu0
        %v1314 = vadd.f32 %v1227, %v1313
        %v1315 = vand.u32 %v924, 4294901760
        %1316 = vmatmul.f32.gmra.mxu0 %v1315
        %v1317 = vpop.f32.mrf.mxu0
        %v1318 = vadd.f32 %v1233, %v1317
        %v1319 = vand.u32 %v925, 4294901760
        %1320 = vmatmul.f32.gmra.mxu0 %v1319
        %v1321 = vpop.f32.mrf.mxu0
        %v1322 = vadd.f32 %v1239, %v1321
        %v1323 = vand.u32 %v926, 4294901760
        %1324 = vmatmul.f32.gmra.mxu0 %v1323
        %v1325 = vpop.f32.mrf.mxu0
        %v1326 = vadd.f32 %v1245, %v1325
        %1327 = vdwg.mxu0
        %v1328 = vand.u32 %v942, 4294901760
        %1329 = vmatpush.msra.mxu0 %v1328
        %v1330 = vand.u32 %v941, 4294901760
        %1331 = vmatpush.msra.mxu0 %v1330
        %v1332 = vand.u32 %v940, 4294901760
        %1333 = vmatpush.msra.mxu0 %v1332
        %v1334 = vand.u32 %v939, 4294901760
        %1335 = vmatpush.msra.mxu0 %v1334
        %v1336 = vand.u32 %v938, 4294901760
        %1337 = vmatpush.msra.mxu0 %v1336
        %v1338 = vand.u32 %v937, 4294901760
        %1339 = vmatpush.msra.mxu0 %v1338
        %v1340 = vand.u32 %v936, 4294901760
        %1341 = vmatpush.msra.mxu0 %v1340
        %v1342 = vand.u32 %v935, 4294901760
        %1343 = vmatpush.msra.mxu0 %v1342
        %v1344 = vand.u32 %v934, 4294901760
        %1345 = vmatpush.msra.mxu0 %v1344
        %v1346 = vand.u32 %v933, 4294901760
        %1347 = vmatpush.msra.mxu0 %v1346
        %v1348 = vand.u32 %v932, 4294901760
        %1349 = vmatpush.msra.mxu0 %v1348
        %v1350 = vand.u32 %v931, 4294901760
        %1351 = vmatpush.msra.mxu0 %v1350
        %v1352 = vand.u32 %v930, 4294901760
        %1353 = vmatpush.msra.mxu0 %v1352
        %v1354 = vand.u32 %v929, 4294901760
        %1355 = vmatpush.msra.mxu0 %v1354
        %v1356 = vand.u32 %v928, 4294901760
        %1357 = vmatpush.msra.mxu0 %v1356
        %v1358 = vand.u32 %v927, 4294901760
        %1359 = vmatpush.msra.mxu0 %v1358
        %v1360 = vand.u32 %v923, 4294901760
        %1361 = vmatmul.f32.gmra.mxu0 %v1360
        %v1362 = vpop.f32.mrf.mxu0
        %v1363 = vadd.f32 %v1314, %v1362
        %v1364 = vand.u32 %v924, 4294901760
        %1365 = vmatmul.f32.gmra.mxu0 %v1364
        %v1366 = vpop.f32.mrf.mxu0
        %v1367 = vadd.f32 %v1318, %v1366
        %v1368 = vand.u32 %v925, 4294901760
        %1369 = vmatmul.f32.gmra.mxu0 %v1368
        %v1370 = vpop.f32.mrf.mxu0
        %v1371 = vadd.f32 %v1322, %v1370
        %v1372 = vand.u32 %v926, 4294901760
        %1373 = vmatmul.f32.gmra.mxu0 %v1372
        %v1374 = vpop.f32.mrf.mxu0
        %v1375 = vadd.f32 %v1326, %v1374
        %1376 = vdwg.mxu0
        %v1377 = vadd.f32 %v923, %v1363
        %v1378 = vadd.f32 %v924, %v1367
        %v1379 = vadd.f32 %v925, %v1371
        %v1380 = vadd.f32 %v926, %v1375
        %1381 = vst [vmem:[%s315] sm:$0xff] %v1377
        %1382 = vst [vmem:[%s315 + $0x8] sm:$0xff] %v1378
        %1383 = vst [vmem:[%s315 + $0x10] sm:$0xff] %v1379
        %1384 = vst [vmem:[%s315 + $0x18] sm:$0xff] %v1380
        %s1385 = sand.u32 %s163, 1
        %s1386 = sand.u32 %s163, 1
        %s1387 = smul.addr %s1386, 32
        %s1388 = scalar_lea.vmem [#allocation6], %s1387
        // Predicated region
        $region53: #{controller_v4_forward.1} parent=43 // pred_check
          %p1389 = pneg %p173
        $region54: #{controller_v4_forward.1} parent=43 // pred_check_branch
          %1391 = sbr.rel (%p1389) target = $region56
        $region55: #{controller_v4_forward.1} parent=43 // pred_region
          %s1392 = smul.u32 4, %s19
          %s1393 = ssub.s32 7, %s1392
          %p1394 = scmp.lt.s32.totalorder %s1393, 4
          %s1395 = scalar_select %p1394, %s1393, 4
          %s1396 = smul.u32 8, %s1395
          %p1397 = scmp.ne.s32.totalorder 0, %s1396
          %s1398 = smul.addr %s1392, 8
          %s1399 = scalar_lea.vmem %s6, %s1398
          // Predicated region
          $region57: #{controller_v4_forward.1} parent=55 // pred_check
            %p1400 = pneg %p1397
          $region58: #{controller_v4_forward.1} parent=55 // pred_check_branch
            %1402 = sbr.rel (%p1400) target = $region60
          $region59: #{controller_v4_forward.1} parent=55 // pred_region
            // Predicated region
            $region61: #{controller_v4_forward.1} parent=59 // pred_check
              _
            $region62: #{controller_v4_forward.1} parent=59 // pred_check_branch
              %1404 = sbr.rel (0) target = $region64
            $region63: #{controller_v4_forward.1} parent=59 // pred_region
              // Predicated region
              $region83: #{controller_v4_forward.1} parent=63 // pred_check
                _
              $region84: #{controller_v4_forward.1} parent=63 // pred_check_branch
                %1460 = sbr.rel (0) target = $region86
              $region85: #{controller_v4_forward.1} parent=63 // pred_region
                %s1461 = sshrl.u32 %s1395, 2
                // While loop
                $region87: #{controller_v4_forward.1} parent=85 // loop_pre_header
                  _
                $region88: #{controller_v4_forward.1} parent=85 // loop_header
                  %s1463 = sphi 0, %s1465
                  %p1464 = scmp.ge.s32.totalorder %s1463, %s1461
                  %s1468 = sphi 0, %s1481
                  %s1469 = sphi %s1388, %s1484
                  %s1470 = sphi %s1399, %s1485
                $region89: #{controller_v4_forward.1} parent=85 // loop_header_branch
                  %1467 = sbr.rel (%p1464) target = $region93
                $region90: #{controller_v4_forward.1} parent=85 // loop_body
                  %v1471 = vld [vmem:[%s1469] sm:$0xff]
                  %1472 = vst [vmem:[%s1470] sm:$0xff] %v1471
                  %v1473 = vld [vmem:[%s1469 + $0x8] sm:$0xff]
                  %1474 = vst [vmem:[%s1470 + $0x8] sm:$0xff] %v1473
                  %v1475 = vld [vmem:[%s1469 + $0x10] sm:$0xff]
                  %1476 = vst [vmem:[%s1470 + $0x10] sm:$0xff] %v1475
                  %v1477 = vld [vmem:[%s1469 + $0x18] sm:$0xff]
                  %1478 = vst [vmem:[%s1470 + $0x18] sm:$0xff] %v1477
                  %s1479 = sadd.s32 1, %s1468
                  %p1480 = scmp.ge.s32.totalorder %s1479, %s1461
                  %s1481 = scalar_select %p1480, 0, %s1479
                  %s1482 = smul.u32 %s1481, 32
                  %s1483 = smul.u32 %s1481, 32
                  %s1484 = scalar_lea.vmem %s1388, %s1482 [#allocation6]
                  %s1485 = scalar_lea.vmem %s1399, %s1483
                $region91: #{controller_v4_forward.1} parent=85 // loop_footer
                  %s1465 = sadd.s32 %s1463, 1
                $region92: #{controller_v4_forward.1} parent=85 // loop_footer_branch
                  %1462 = sbr.rel target = $region88
                $region93: #{controller_v4_forward.1} parent=85 // loop_exit
                  _
                %s1486 = sshrl.u32 %s1395, 2
                %s1487 = sand.u32 %s1395, 3
                %s1488 = smul.u32 %s1486, 4
                %s1489 = smul.u32 8, %s1488
                %s1490 = scalar_lea.vmem %s1388, %s1489 [#allocation6]
                %s1491 = smul.u32 8, %s1488
                %s1492 = scalar_lea.vmem %s1399, %s1491
                // While loop
                $region94: #{controller_v4_forward.1} parent=85 // loop_pre_header
                  _
                $region95: #{controller_v4_forward.1} parent=85 // loop_header
                  %s1494 = sphi 0, %s1496
                  %p1495 = scmp.ge.s32.totalorder %s1494, %s1487
                  %s1499 = sphi 0, %s1506
                  %s1500 = sphi %s1490, %s1509
                  %s1501 = sphi %s1492, %s1510
                $region96: #{controller_v4_forward.1} parent=85 // loop_header_branch
                  %1498 = sbr.rel (%p1495) target = $region100
                $region97: #{controller_v4_forward.1} parent=85 // loop_body
                  %v1502 = vld [vmem:[%s1500] sm:$0xff]
                  %1503 = vst [vmem:[%s1501] sm:$0xff] %v1502
                  %s1504 = sadd.s32 1, %s1499
                  %p1505 = scmp.ge.s32.totalorder %s1504, %s1487
                  %s1506 = scalar_select %p1505, 0, %s1504
                  %s1507 = smul.u32 %s1506, 8
                  %s1508 = smul.u32 %s1506, 8
                  %s1509 = scalar_lea.vmem %s1490, %s1507 [#allocation6]
                  %s1510 = scalar_lea.vmem %s1492, %s1508
                $region98: #{controller_v4_forward.1} parent=85 // loop_footer
                  %s1496 = sadd.s32 %s1494, 1
                $region99: #{controller_v4_forward.1} parent=85 // loop_footer_branch
                  %1493 = sbr.rel target = $region95
                $region100: #{controller_v4_forward.1} parent=85 // loop_exit
                  _
              $region86: #{controller_v4_forward.1} parent=63 // pred_fallthru
                _
              // Predicated region
              $region101: #{controller_v4_forward.1} parent=63 // pred_check
                _
              $region102: #{controller_v4_forward.1} parent=63 // pred_check_branch
                %1512 = sbr.rel target = $region104
              $region103: #{controller_v4_forward.1} parent=63 // pred_region
                _
              $region104: #{controller_v4_forward.1} parent=63 // pred_fallthru
                _
            $region64: #{controller_v4_forward.1} parent=59 // pred_fallthru
              _
            // Predicated region
            $region65: #{controller_v4_forward.1} parent=59 // pred_check
              _
            $region66: #{controller_v4_forward.1} parent=59 // pred_check_branch
              %1406 = sbr.rel target = $region68
            $region67: #{controller_v4_forward.1} parent=59 // pred_region
              %s1408 = ssub.s32 256, 1
              %s1409 = sshrl.u32 %s1395, 2
              // While loop
              $region69: #{controller_v4_forward.1} parent=67 // loop_pre_header
                _
              $region70: #{controller_v4_forward.1} parent=67 // loop_header
                %s1411 = sphi 0, %s1413
                %p1412 = scmp.ge.s32.totalorder %s1411, %s1409
                %s1416 = sphi 0, %s1429
                %s1417 = sphi %s1388, %s1432
                %s1418 = sphi %s1399, %s1433
              $region71: #{controller_v4_forward.1} parent=67 // loop_header_branch
                %1415 = sbr.rel (%p1412) target = $region75
              $region72: #{controller_v4_forward.1} parent=67 // loop_body
                %v1419 = vld [vmem:[%s1417] sm:%s1408]
                %1420 = vst [vmem:[%s1418] sm:%s1408] %v1419
                %v1421 = vld [vmem:[%s1417 + $0x8] sm:%s1408]
                %1422 = vst [vmem:[%s1418 + $0x8] sm:%s1408] %v1421
                %v1423 = vld [vmem:[%s1417 + $0x10] sm:%s1408]
                %1424 = vst [vmem:[%s1418 + $0x10] sm:%s1408] %v1423
                %v1425 = vld [vmem:[%s1417 + $0x18] sm:%s1408]
                %1426 = vst [vmem:[%s1418 + $0x18] sm:%s1408] %v1425
                %s1427 = sadd.s32 1, %s1416
                %p1428 = scmp.ge.s32.totalorder %s1427, %s1409
                %s1429 = scalar_select %p1428, 0, %s1427
                %s1430 = smul.u32 %s1429, 32
                %s1431 = smul.u32 %s1429, 32
                %s1432 = scalar_lea.vmem %s1388, %s1430 [#allocation6]
                %s1433 = scalar_lea.vmem %s1399, %s1431
              $region73: #{controller_v4_forward.1} parent=67 // loop_footer
                %s1413 = sadd.s32 %s1411, 1
              $region74: #{controller_v4_forward.1} parent=67 // loop_footer_branch
                %1410 = sbr.rel target = $region70
              $region75: #{controller_v4_forward.1} parent=67 // loop_exit
                _
              %s1434 = sshrl.u32 %s1395, 2
              %s1435 = sand.u32 %s1395, 3
              %s1436 = smul.u32 %s1434, 4
              %s1437 = smul.u32 8, %s1436
              %s1438 = scalar_lea.vmem %s1388, %s1437 [#allocation6]
              %s1439 = smul.u32 8, %s1436
              %s1440 = scalar_lea.vmem %s1399, %s1439
              // While loop
              $region76: #{controller_v4_forward.1} parent=67 // loop_pre_header
                _
              $region77: #{controller_v4_forward.1} parent=67 // loop_header
                %s1442 = sphi 0, %s1444
                %p1443 = scmp.ge.s32.totalorder %s1442, %s1435
                %s1447 = sphi 0, %s1454
                %s1448 = sphi %s1438, %s1457
                %s1449 = sphi %s1440, %s1458
              $region78: #{controller_v4_forward.1} parent=67 // loop_header_branch
                %1446 = sbr.rel (%p1443) target = $region82
              $region79: #{controller_v4_forward.1} parent=67 // loop_body
                %v1450 = vld [vmem:[%s1448] sm:%s1408]
                %1451 = vst [vmem:[%s1449] sm:%s1408] %v1450
                %s1452 = sadd.s32 1, %s1447
                %p1453 = scmp.ge.s32.totalorder %s1452, %s1435
                %s1454 = scalar_select %p1453, 0, %s1452
                %s1455 = smul.u32 %s1454, 8
                %s1456 = smul.u32 %s1454, 8
                %s1457 = scalar_lea.vmem %s1438, %s1455 [#allocation6]
                %s1458 = scalar_lea.vmem %s1440, %s1456
              $region80: #{controller_v4_forward.1} parent=67 // loop_footer
                %s1444 = sadd.s32 %s1442, 1
              $region81: #{controller_v4_forward.1} parent=67 // loop_footer_branch
                %1441 = sbr.rel target = $region77
              $region82: #{controller_v4_forward.1} parent=67 // loop_exit
                _
            $region68: #{controller_v4_forward.1} parent=59 // pred_fallthru
              _
          $region60: #{controller_v4_forward.1} parent=55 // pred_fallthru
            _
          %1513 = vnop
        $region56: #{controller_v4_forward.1} parent=43 // pred_fallthru
          _
      $region44: #{controller_v4_forward.1} parent=5 // pred_fallthru
        _
      %p1514 = scmp.le.s32.totalorder 2, %s14
      // Predicated region
      $region105: #{controller_v4_forward.1} parent=5 // pred_check
        %p1515 = pneg %p1514
      $region106: #{controller_v4_forward.1} parent=5 // pred_check_branch
        %1517 = sbr.rel (%p1515) target = $region108
      $region107: #{controller_v4_forward.1} parent=5 // pred_region
        %s1518 = ssub.s32 %s14, 2
        // Predicated region
        $region109: #{controller_v4_forward.1} parent=107 // pred_check
          %p1519 = pneg %p179
        $region110: #{controller_v4_forward.1} parent=107 // pred_check_branch
          %1521 = sbr.rel (%p1519) target = $region112
        $region111: #{controller_v4_forward.1} parent=107 // pred_region
          %s1522 = sand.u32 %s164, 1
          %s1523 = sand.u32 %s164, 1
          %s1524 = smul.addr %s1523, 32
          %s1525 = scalar_lea.vmem [#allocation6], %s1524
        $region112: #{controller_v4_forward.1} parent=107 // pred_fallthru
          _
      $region108: #{controller_v4_forward.1} parent=5 // pred_fallthru
        _
    $region6: #{controller_v4_forward.1} parent=1 // loop_footer
      %s18 = sadd.s32 1, %s14
    $region7: #{controller_v4_forward.1} parent=1 // loop_footer_branch
      %13 = sbr.rel target = $region3
    $region8: #{controller_v4_forward.1} parent=1 // loop_exit
      _
    %1526 = vsyncpa [#allocation3], 1
    %s1527 = scalar_lea.sflag [#allocation3], 1
    %1528 = vsyncpa %s1527, 1
    %1529 = vsyncpa [#allocation5], 1

</llo_original>
